<compile_context>
chip_gen: v7x
topology: tpu7x:2x2x1
jax: 0.10.0
libtpu: 0.0.40
codegen_flags: <defaults>
</compile_context>

<pallas_src>
import functools
import numpy as np
import jax
import jax.numpy as jnp
from jax import lax
from jax.experimental import pallas as pl
from jax.experimental.pallas import tpu as pltpu


# ---------------------------------------------------------------------------
# Pallas kernel: whole batch in one invocation (grid=(1,)).
# ---------------------------------------------------------------------------
def _nonlocal_kernel(feat_ref, newpt_ref,
                     wtf1_ref, btf1_ref,
                     wtf2_ref, btf2_ref,
                     wtnp_ref, btnp_ref,
                     wnnp_ref, bnnp_ref,
                     out_ref, *,
                     B, FD, PS, bottleneck, compute_dtype):
    cdt = compute_dtype
    feat = feat_ref[...].astype(cdt)     # (B*FD, FC)
    newpt = newpt_ref[...].astype(cdt)   # (B*PS, C)

    # Stacked-batch projections (1x1 conv + folded BN) as 2-D matmuls.
    # keys / values as two independent matmuls (no lane slice of a 2*bc block).
    tf1 = jnp.dot(feat, wtf1_ref[...], preferred_element_type=jnp.float32) + btf1_ref[...]
    tf2 = jnp.dot(feat, wtf2_ref[...], preferred_element_type=jnp.float32) + btf2_ref[...]
    # queries; the 1/sqrt(bottleneck) attention scale is pre-folded into w/b.
    tnp = jnp.dot(newpt, wtnp_ref[...], preferred_element_type=jnp.float32) + btnp_ref[...]

    tf1 = tf1.reshape(B, FD, bottleneck).astype(cdt)
    tf2 = tf2.reshape(B, FD, bottleneck).astype(cdt)
    tnp = tnp.reshape(B, PS, bottleneck).astype(cdt)

    # attention scores: batched over B, contracting the last (channel) axis of
    # both operands -> no explicit transpose of tf1.
    attn = lax.dot_general(
        tnp, tf1,
        dimension_numbers=(((2,), (2,)), ((0,), (0,))),
        preferred_element_type=jnp.float32)               # (B, PS, FD) f32

    # softmax over the FD axis (f32 math; divide via approx reciprocal on EUP).
    attn = attn - jnp.max(attn, axis=-1, keepdims=True)
    attn = jnp.exp(attn)
    attn = attn * pl.reciprocal(jnp.sum(attn, axis=-1, keepdims=True), approx=True)

    # aggregation: (B, PS, FD) x (B, FD, bc) -> (B, PS, bc)
    nnl = lax.dot_general(
        attn.astype(cdt), tf2,
        dimension_numbers=(((2,), (1,)), ((0,), (0,))),
        preferred_element_type=jnp.float32)

    # final 1x1 conv + folded BN on the stacked batch; output lanes are padded
    # to a multiple of 128 so the store below is unmasked / lane-dense.
    out = jnp.dot(nnl.reshape(B * PS, bottleneck).astype(cdt), wnnp_ref[...],
                  preferred_element_type=jnp.float32) + bnnp_ref[...]
    out_ref[...] = out.astype(out_ref.dtype)


# ---------------------------------------------------------------------------
# Helpers: fold BatchNorm (inference mode) into the preceding 1x1 conv.
# ---------------------------------------------------------------------------
def _fold_bn(w, b, gamma, beta, mean, var, eps=1e-5):
    # w: (Cin, Cout), b: (Cout,)
    scale = gamma / jnp.sqrt(var + eps)
    w_f = w * scale[None, :]
    b_f = (b - mean) * scale + beta
    return w_f, b_f.reshape(1, -1)


# ---------------------------------------------------------------------------
# Wrapper
# ---------------------------------------------------------------------------
def point_nonlocal_cell(feature, new_point, params, bottleneck,
                        compute_dtype=jnp.bfloat16):
    """feature: (B, FD, FC) f32;  new_point: (B, P, S, C) f32."""
    B, P, S, C = new_point.shape
    _, FD, FC = feature.shape
    PS = P * S

    out_ch = params["w_nnp"].shape[1]
    OUT_PAD = ((out_ch + 127) // 128) * 128            # lane-dense output store

    cdt = compute_dtype
    f32 = jnp.float32

    # Split the fused (FC, 2*bc) projection into keys / values weights.
    w_tf1 = params["w_tf"][:, :bottleneck].astype(cdt)
    w_tf2 = params["w_tf"][:, bottleneck:].astype(cdt)
    b_tf1 = params["b_tf"][:, :bottleneck].astype(f32)
    b_tf2 = params["b_tf"][:, bottleneck:].astype(f32)

    # Fold the 1/sqrt(bc) attention scale into the query projection.
    scale = f32(1.0 / np.sqrt(bottleneck))
    w_tnp = (params["w_tnp"] * scale).astype(cdt)
    b_tnp = (params["b_tnp"] * scale).astype(f32)

    # Zero-pad the output projection to 128 lanes (unmasked stores).
    w_nnp = jnp.pad(params["w_nnp"], ((0, 0), (0, OUT_PAD - out_ch))).astype(cdt)
    b_nnp = jnp.pad(params["b_nnp"], ((0, 0), (0, OUT_PAD - out_ch))).astype(f32)

    # Stack batches so the projections are single big matmuls.
    feat2d = feature.reshape(B * FD, FC)
    newpt2d = new_point.reshape(B * PS, C)

    kernel = functools.partial(_nonlocal_kernel, B=B, FD=FD, PS=PS,
                               bottleneck=bottleneck, compute_dtype=cdt)

    # TODO(synk): for production-scale FD / PS (large point clouds) add a
    # parallel grid axis over PS tiles with an online softmax so the working
    # set fits v7x's 64 MiB VMEM and both TensorCores get work.
    out = pl.pallas_call(
        kernel,
        out_shape=jax.ShapeDtypeStruct((B * PS, OUT_PAD), jnp.float32),
        grid=(1,),
        in_specs=[
            pl.BlockSpec((B * FD, FC), lambda i: (0, 0)),
            pl.BlockSpec((B * PS, C), lambda i: (0, 0)),
            pl.BlockSpec((FC, bottleneck), lambda i: (0, 0)),
            pl.BlockSpec((1, bottleneck), lambda i: (0, 0)),
            pl.BlockSpec((FC, bottleneck), lambda i: (0, 0)),
            pl.BlockSpec((1, bottleneck), lambda i: (0, 0)),
            pl.BlockSpec((C, bottleneck), lambda i: (0, 0)),
            pl.BlockSpec((1, bottleneck), lambda i: (0, 0)),
            pl.BlockSpec((bottleneck, OUT_PAD), lambda i: (0, 0)),
            pl.BlockSpec((1, OUT_PAD), lambda i: (0, 0)),
        ],
        out_specs=pl.BlockSpec((B * PS, OUT_PAD), lambda i: (0, 0)),
        compiler_params=pltpu.CompilerParams(
            dimension_semantics=("arbitrary",)),
    )(feat2d, newpt2d, w_tf1, b_tf1, w_tf2, b_tf2, w_tnp, b_tnp, w_nnp, b_nnp)

    out = out[:, :out_ch].reshape(B, P, S, out_ch)
    # torch.squeeze(x, 1): only drops dim 1 when P == 1
    if P == 1:
        out = jnp.squeeze(out, axis=1)
    return out


# ---------------------------------------------------------------------------
# Pure-JAX reference (same folded-BN inference semantics) for verification.
# ---------------------------------------------------------------------------
def _reference(feature, new_point, params, bottleneck):
    B, P, S, C = new_point.shape
    tf = jnp.einsum("bdc,co->bdo", feature, params["w_tf"]) + params["b_tf"]
    tnp = jnp.einsum("bpsc,co->bpso", new_point, params["w_tnp"]) + params["b_tnp"]
    tnp = tnp.reshape(B, P * S, bottleneck)
    tf1, tf2 = tf[..., :bottleneck], tf[..., bottleneck:]
    attn = jnp.einsum("bnc,bdc->bnd", tnp, tf1) / np.sqrt(bottleneck)
    attn = jax.nn.softmax(attn, axis=-1)
    nnl = jnp.einsum("bnd,bdc->bnc", attn, tf2)
    out = jnp.einsum("bnc,co->bno", nnl, params["w_nnp"]) + params["b_nnp"]
    out = out.reshape(B, P, S, -1)
    if P == 1:
        out = jnp.squeeze(out, axis=1)
    return out


if __name__ == "__main__":
    # Module config: feature_channel=16, in_channel=16, mlps=[32, 32]
    FC_CH = 16       # feature_channel
    IN_CH = 16       # in_channel
    MLPS = [32, 32]  # bottleneck = 32, out = 32
    BC = MLPS[0]
    OUT = MLPS[-1]

    B, FD = 2, 16    # batch, ndataset
    P, S = 8, 8      # npoint, nsample

    key = jax.random.PRNGKey(0)
    keys = jax.random.split(key, 16)

    feature = jax.random.normal(keys[0], (B, FD, FC_CH), jnp.float32)
    new_point = jax.random.normal(keys[1], (B, P, S, IN_CH), jnp.float32)

    def conv_w(k, cin, cout):
        # deterministic init ~ Conv2d(cin, cout, 1) weight, stored as (cin, cout)
        return jax.random.normal(k, (cin, cout), jnp.float32) * (1.0 / np.sqrt(cin))

    def bn_params(k, c):
        k1, k2, k3, k4 = jax.random.split(k, 4)
        gamma = 1.0 + 0.1 * jax.random.normal(k1, (c,), jnp.float32)
        beta = 0.1 * jax.random.normal(k2, (c,), jnp.float32)
        mean = 0.1 * jax.random.normal(k3, (c,), jnp.float32)
        var = jnp.abs(1.0 + 0.1 * jax.random.normal(k4, (c,), jnp.float32))
        return gamma, beta, mean, var

    # TODO(synk): BatchNorm2d is applied in inference mode (running stats folded
    # into the 1x1 convs); training-mode batch statistics are not computed.
    w1 = conv_w(keys[2], FC_CH, 2 * BC); b1 = 0.05 * jax.random.normal(keys[3], (2 * BC,))
    w2 = conv_w(keys[4], IN_CH, BC);     b2 = 0.05 * jax.random.normal(keys[5], (BC,))
    w3 = conv_w(keys[6], BC, OUT);       b3 = 0.05 * jax.random.normal(keys[7], (OUT,))

    w_tf, b_tf = _fold_bn(w1, b1, *bn_params(keys[8], 2 * BC))
    w_tnp, b_tnp = _fold_bn(w2, b2, *bn_params(keys[9], BC))
    w_nnp, b_nnp = _fold_bn(w3, b3, *bn_params(keys[10], OUT))

    params = dict(w_tf=w_tf, b_tf=b_tf, w_tnp=w_tnp, b_tnp=b_tnp,
                  w_nnp=w_nnp, b_nnp=b_nnp)

    ref = _reference(feature, new_point, params, BC)

    # f32 compute path: verifies kernel structure tightly.
    out_f32 = point_nonlocal_cell(feature, new_point, params, BC,
                                  compute_dtype=jnp.float32)
    out_f32 = jax.block_until_ready(out_f32)
    assert out_f32.shape == (B, P, S, OUT), out_f32.shape
    np.testing.assert_allclose(np.asarray(out_f32), np.asarray(ref),
                               rtol=2e-2, atol=2e-2)

    # bf16 compute path (the optimized default): looser tolerance for
    # bf16-rounded matmul operands (f32 accumulation / softmax).
    out_bf16 = point_nonlocal_cell(feature, new_point, params, BC,
                                   compute_dtype=jnp.bfloat16)
    out_bf16 = jax.block_until_ready(out_bf16)
    assert out_bf16.shape == (B, P, S, OUT), out_bf16.shape
    np.testing.assert_allclose(np.asarray(out_bf16), np.asarray(ref),
                               rtol=1e-1, atol=5e-2)

    print("KERNEL_OK")
</pallas_src>

<mosaic_0001>
module attributes {stable_mosaic.version = 11 : i64} {
  func.func @_nonlocal_kernel(%arg0: i32, %arg1: memref<32x16xf32, #tpu.memory_space<vmem>>, %arg2: memref<128x16xf32, #tpu.memory_space<vmem>>, %arg3: memref<16x32xf32, #tpu.memory_space<vmem>>, %arg4: memref<1x32xf32, #tpu.memory_space<vmem>>, %arg5: memref<16x32xf32, #tpu.memory_space<vmem>>, %arg6: memref<1x32xf32, #tpu.memory_space<vmem>>, %arg7: memref<16x32xf32, #tpu.memory_space<vmem>>, %arg8: memref<1x32xf32, #tpu.memory_space<vmem>>, %arg9: memref<32x128xf32, #tpu.memory_space<vmem>>, %arg10: memref<1x128xf32, #tpu.memory_space<vmem>>, %arg11: memref<128x128xf32, #tpu.memory_space<vmem>>) attributes {dimension_semantics = [#tpu.dimension_semantics<arbitrary>], iteration_bounds = array<i64: 1>, scalar_prefetch = 0 : i64, scratch_operands = 0 : i64, tpu.core_type = #tpu.core_type<tc>, window_params = [{pipeline_mode = #tpu.pipeline_mode<synchronous>, transform_indices = @transform_0, window_bounds = array<i64: 32, 16>}, {pipeline_mode = #tpu.pipeline_mode<synchronous>, transform_indices = @transform_1, window_bounds = array<i64: 128, 16>}, {pipeline_mode = #tpu.pipeline_mode<synchronous>, transform_indices = @transform_2, window_bounds = array<i64: 16, 32>}, {pipeline_mode = #tpu.pipeline_mode<synchronous>, transform_indices = @transform_3, window_bounds = array<i64: 1, 32>}, {pipeline_mode = #tpu.pipeline_mode<synchronous>, transform_indices = @transform_4, window_bounds = array<i64: 16, 32>}, {pipeline_mode = #tpu.pipeline_mode<synchronous>, transform_indices = @transform_5, window_bounds = array<i64: 1, 32>}, {pipeline_mode = #tpu.pipeline_mode<synchronous>, transform_indices = @transform_6, window_bounds = array<i64: 16, 32>}, {pipeline_mode = #tpu.pipeline_mode<synchronous>, transform_indices = @transform_7, window_bounds = array<i64: 1, 32>}, {pipeline_mode = #tpu.pipeline_mode<synchronous>, transform_indices = @transform_8, window_bounds = array<i64: 32, 128>}, {pipeline_mode = #tpu.pipeline_mode<synchronous>, transform_indices = @transform_9, window_bounds = array<i64: 1, 128>}, {pipeline_mode = #tpu.pipeline_mode<synchronous>, transform_indices = @transform_10, window_bounds = array<i64: 128, 128>}]} {
    %c0 = arith.constant 0 : index
    %c0_0 = arith.constant 0 : index
    %0 = vector.load %arg1[%c0, %c0_0] : memref<32x16xf32, #tpu.memory_space<vmem>>, vector<32x16xf32>
    %c0_1 = arith.constant 0 : index
    %c0_2 = arith.constant 0 : index
    %1 = vector.load %arg2[%c0_1, %c0_2] : memref<128x16xf32, #tpu.memory_space<vmem>>, vector<128x16xf32>
    %c0_3 = arith.constant 0 : index
    %c0_4 = arith.constant 0 : index
    %2 = vector.load %arg3[%c0_3, %c0_4] : memref<16x32xf32, #tpu.memory_space<vmem>>, vector<16x32xf32>
    %cst = arith.constant dense<0.000000e+00> : vector<32x32xf32>
    %3 = tpu.matmul %0, %2, %cst {dimension_numbers = #tpu.dot_dimension_numbers<[1], [0], [0], [1], [0, 0, 1, 1], [], []>} : vector<32x16xf32>, vector<16x32xf32>, vector<32x32xf32> -> vector<32x32xf32>
    %c0_5 = arith.constant 0 : index
    %c0_6 = arith.constant 0 : index
    %4 = vector.load %arg4[%c0_5, %c0_6] : memref<1x32xf32, #tpu.memory_space<vmem>>, vector<1x32xf32>
    %5 = vector.broadcast %4 : vector<1x32xf32> to vector<32x32xf32>
    %6 = arith.addf %3, %5 : vector<32x32xf32>
    %c0_7 = arith.constant 0 : index
    %c0_8 = arith.constant 0 : index
    %7 = vector.load %arg5[%c0_7, %c0_8] : memref<16x32xf32, #tpu.memory_space<vmem>>, vector<16x32xf32>
    %cst_9 = arith.constant dense<0.000000e+00> : vector<32x32xf32>
    %8 = tpu.matmul %0, %7, %cst_9 {dimension_numbers = #tpu.dot_dimension_numbers<[1], [0], [0], [1], [0, 0, 1, 1], [], []>} : vector<32x16xf32>, vector<16x32xf32>, vector<32x32xf32> -> vector<32x32xf32>
    %c0_10 = arith.constant 0 : index
    %c0_11 = arith.constant 0 : index
    %9 = vector.load %arg6[%c0_10, %c0_11] : memref<1x32xf32, #tpu.memory_space<vmem>>, vector<1x32xf32>
    %10 = vector.broadcast %9 : vector<1x32xf32> to vector<32x32xf32>
    %11 = arith.addf %8, %10 : vector<32x32xf32>
    %c0_12 = arith.constant 0 : index
    %c0_13 = arith.constant 0 : index
    %12 = vector.load %arg7[%c0_12, %c0_13] : memref<16x32xf32, #tpu.memory_space<vmem>>, vector<16x32xf32>
    %cst_14 = arith.constant dense<0.000000e+00> : vector<128x32xf32>
    %13 = tpu.matmul %1, %12, %cst_14 {dimension_numbers = #tpu.dot_dimension_numbers<[1], [0], [0], [1], [0, 0, 1, 1], [], []>} : vector<128x16xf32>, vector<16x32xf32>, vector<128x32xf32> -> vector<128x32xf32>
    %c0_15 = arith.constant 0 : index
    %c0_16 = arith.constant 0 : index
    %14 = vector.load %arg8[%c0_15, %c0_16] : memref<1x32xf32, #tpu.memory_space<vmem>>, vector<1x32xf32>
    %15 = vector.broadcast %14 : vector<1x32xf32> to vector<128x32xf32>
    %16 = arith.addf %13, %15 : vector<128x32xf32>
    %17 = vector.shape_cast %6 : vector<32x32xf32> to vector<2x16x32xf32>
    %18 = vector.shape_cast %11 : vector<32x32xf32> to vector<2x16x32xf32>
    %19 = vector.shape_cast %16 : vector<128x32xf32> to vector<2x64x32xf32>
    %cst_17 = arith.constant dense<0.000000e+00> : vector<2x64x16xf32>
    %20 = tpu.matmul %19, %17, %cst_17 {dimension_numbers = #tpu.dot_dimension_numbers<[2], [2], [1], [1], [0, 0, 0, 1, 1, 1], [0], [0]>} : vector<2x64x32xf32>, vector<2x16x32xf32>, vector<2x64x16xf32> -> vector<2x64x16xf32>
    %cst_18 = arith.constant dense<0xFF800000> : vector<2x64xf32>
    %21 = vector.multi_reduction <maximumf>, %20, %cst_18 [2] : vector<2x64x16xf32> to vector<2x64xf32>
    %22 = vector.shape_cast %21 : vector<2x64xf32> to vector<2x64x1xf32>
    %23 = vector.broadcast %22 : vector<2x64x1xf32> to vector<2x64x16xf32>
    %24 = arith.subf %20, %23 : vector<2x64x16xf32>
    %25 = math.exp %24 : vector<2x64x16xf32>
    %cst_19 = arith.constant dense<0.000000e+00> : vector<2x64xf32>
    %26 = vector.multi_reduction <add>, %25, %cst_19 [2] : vector<2x64x16xf32> to vector<2x64xf32>
    %27 = vector.shape_cast %26 : vector<2x64xf32> to vector<2x64x1xf32>
    %28 = tpu.reciprocal %27 {approx = true} : vector<2x64x1xf32> -> vector<2x64x1xf32>
    %29 = vector.broadcast %28 : vector<2x64x1xf32> to vector<2x64x16xf32>
    %30 = arith.mulf %25, %29 : vector<2x64x16xf32>
    %cst_20 = arith.constant dense<0.000000e+00> : vector<2x64x32xf32>
    %31 = tpu.matmul %30, %18, %cst_20 {dimension_numbers = #tpu.dot_dimension_numbers<[2], [1], [1], [2], [0, 0, 0, 1, 1, 2], [0], [0]>} : vector<2x64x16xf32>, vector<2x16x32xf32>, vector<2x64x32xf32> -> vector<2x64x32xf32>
    %32 = vector.shape_cast %31 : vector<2x64x32xf32> to vector<128x32xf32>
    %c0_21 = arith.constant 0 : index
    %c0_22 = arith.constant 0 : index
    %33 = vector.load %arg9[%c0_21, %c0_22] : memref<32x128xf32, #tpu.memory_space<vmem>>, vector<32x128xf32>
    %cst_23 = arith.constant dense<0.000000e+00> : vector<128x128xf32>
    %34 = tpu.matmul %32, %33, %cst_23 {dimension_numbers = #tpu.dot_dimension_numbers<[1], [0], [0], [1], [0, 0, 1, 1], [], []>} : vector<128x32xf32>, vector<32x128xf32>, vector<128x128xf32> -> vector<128x128xf32>
    %c0_24 = arith.constant 0 : index
    %c0_25 = arith.constant 0 : index
    %35 = vector.load %arg10[%c0_24, %c0_25] : memref<1x128xf32, #tpu.memory_space<vmem>>, vector<1x128xf32>
    %36 = vector.broadcast %35 : vector<1x128xf32> to vector<128x128xf32>
    %37 = arith.addf %34, %36 : vector<128x128xf32>
    %c0_26 = arith.constant 0 : index
    %c0_27 = arith.constant 0 : index
    %38 = vector.load %arg11[%c0_26, %c0_27] : memref<128x128xf32, #tpu.memory_space<vmem>>, vector<128x128xf32>
    tpu.vector_store %arg11[%c0_26, %c0_27], %37 {strides = array<i32>} : memref<128x128xf32, #tpu.memory_space<vmem>>, vector<128x128xf32>,
    return
  }
  func.func @transform_0(%arg0: i32) -> (i32, i32) {
    %c0_i32 = arith.constant 0 : i32
    %c0_i32_0 = arith.constant 0 : i32
    %c0_i32_1 = arith.constant 0 : i32
    return %c0_i32, %c0_i32_0 : i32, i32
  }
  func.func @transform_1(%arg0: i32) -> (i32, i32) {
    %c0_i32 = arith.constant 0 : i32
    %c0_i32_0 = arith.constant 0 : i32
    %c0_i32_1 = arith.constant 0 : i32
    return %c0_i32, %c0_i32_0 : i32, i32
  }
  func.func @transform_2(%arg0: i32) -> (i32, i32) {
    %c0_i32 = arith.constant 0 : i32
    %c0_i32_0 = arith.constant 0 : i32
    %c0_i32_1 = arith.constant 0 : i32
    return %c0_i32, %c0_i32_0 : i32, i32
  }
  func.func @transform_3(%arg0: i32) -> (i32, i32) {
    %c0_i32 = arith.constant 0 : i32
    %c0_i32_0 = arith.constant 0 : i32
    %c0_i32_1 = arith.constant 0 : i32
    return %c0_i32, %c0_i32_0 : i32, i32
  }
  func.func @transform_4(%arg0: i32) -> (i32, i32) {
    %c0_i32 = arith.constant 0 : i32
    %c0_i32_0 = arith.constant 0 : i32
    %c0_i32_1 = arith.constant 0 : i32
    return %c0_i32, %c0_i32_0 : i32, i32
  }
  func.func @transform_5(%arg0: i32) -> (i32, i32) {
    %c0_i32 = arith.constant 0 : i32
    %c0_i32_0 = arith.constant 0 : i32
    %c0_i32_1 = arith.constant 0 : i32
    return %c0_i32, %c0_i32_0 : i32, i32
  }
  func.func @transform_6(%arg0: i32) -> (i32, i32) {
    %c0_i32 = arith.constant 0 : i32
    %c0_i32_0 = arith.constant 0 : i32
    %c0_i32_1 = arith.constant 0 : i32
    return %c0_i32, %c0_i32_0 : i32, i32
  }
  func.func @transform_7(%arg0: i32) -> (i32, i32) {
    %c0_i32 = arith.constant 0 : i32
    %c0_i32_0 = arith.constant 0 : i32
    %c0_i32_1 = arith.constant 0 : i32
    return %c0_i32, %c0_i32_0 : i32, i32
  }
  func.func @transform_8(%arg0: i32) -> (i32, i32) {
    %c0_i32 = arith.constant 0 : i32
    %c0_i32_0 = arith.constant 0 : i32
    %c0_i32_1 = arith.constant 0 : i32
    return %c0_i32, %c0_i32_0 : i32, i32
  }
  func.func @transform_9(%arg0: i32) -> (i32, i32) {
    %c0_i32 = arith.constant 0 : i32
    %c0_i32_0 = arith.constant 0 : i32
    %c0_i32_1 = arith.constant 0 : i32
    return %c0_i32, %c0_i32_0 : i32, i32
  }
  func.func @transform_10(%arg0: i32) -> (i32, i32) {
    %c0_i32 = arith.constant 0 : i32
    %c0_i32_0 = arith.constant 0 : i32
    %c0_i32_1 = arith.constant 0 : i32
    return %c0_i32, %c0_i32_0 : i32, i32
  }
}

</mosaic_0001>

<llo_original>
// kernel: tpu_custom_call.1
$region0: #{tpu_custom_call.1}
  #allocation0 [shape = 'u32[]', space=smem, size = 0x4, offset = 0x4, fixed_abs, tag = 'smem constant byte address 0x4 - core index']
  #allocation1 [shape = 'u32[144,128]{1,0:T(1,128)}', space=vmem, size = 0x12000, scoped, tag = 'internal scratch']
  %s0 = inlined_call_operand.vmem [shape: f32[32,16], index: 0, kind: input, shape index: {}]
  %s1 = inlined_call_operand.vmem [shape: f32[128,16], index: 1, kind: input, shape index: {}]
  %s2 = inlined_call_operand.vmem [shape: f32[16,32], index: 2, kind: input, shape index: {}]
  %s3 = inlined_call_operand.vmem [shape: f32[1,32], index: 3, kind: input, shape index: {}]
  %s4 = inlined_call_operand.vmem [shape: f32[16,32], index: 4, kind: input, shape index: {}]
  %s5 = inlined_call_operand.vmem [shape: f32[1,32], index: 5, kind: input, shape index: {}]
  %s6 = inlined_call_operand.vmem [shape: f32[16,32], index: 6, kind: input, shape index: {}]
  %s7 = inlined_call_operand.vmem [shape: f32[1,32], index: 7, kind: input, shape index: {}]
  %s8 = inlined_call_operand.vmem [shape: f32[32,128], index: 8, kind: input, shape index: {}]
  %s9 = inlined_call_operand.vmem [shape: f32[1,128], index: 9, kind: input, shape index: {}]
  %s10 = inlined_call_operand.hbm [shape: f32[128,128], index: 10, kind: output, shape index: {}]
  %s11 = sld [smem:[#allocation0]]
  $region50: #{tpu_custom_call.1} parent=0
    _
  %s13 = ssub.s32 1, %s11
  %s14 = scalar_select 0, %s13, %s11
  $region1: #{tpu_custom_call.1} parent=0
    #allocation2 [shape = 'u8[65536]{0}', space=vmem, size = 0x10000, scoped, tag = 'output window, operand 0, single buffered']
    #allocation3 [shape = 's32[1]{0}', space=sflag, size = 0x4, scoped, tag = 'scoped memory for tpu_custom_call.1']
    %15 = vsyncpa [#allocation3], 0
    // Predicated region
    $region2: #{tpu_custom_call.1} parent=1 // pred_check
      _
    $region3: #{tpu_custom_call.1} parent=1 // pred_check_branch
      %17 = sbr.rel (0) target = $region5
    $region4: #{tpu_custom_call.1} parent=1 // pred_region
      _
    $region5: #{tpu_custom_call.1} parent=1 // pred_fallthru
      _
    // Predicated region
    $region6: #{tpu_custom_call.1} parent=1 // pred_check
      _
    $region7: #{tpu_custom_call.1} parent=1 // pred_check_branch
      %19 = sbr.rel (0) target = $region9
    $region8: #{tpu_custom_call.1} parent=1 // pred_region
      _
    $region9: #{tpu_custom_call.1} parent=1 // pred_fallthru
      _
    // Predicated region
    $region10: #{tpu_custom_call.1} parent=1 // pred_check
      _
    $region11: #{tpu_custom_call.1} parent=1 // pred_check_branch
      %21 = sbr.rel (0) target = $region13
    $region12: #{tpu_custom_call.1} parent=1 // pred_region
      _
    $region13: #{tpu_custom_call.1} parent=1 // pred_fallthru
      _
    // Predicated region
    $region14: #{tpu_custom_call.1} parent=1 // pred_check
      _
    $region15: #{tpu_custom_call.1} parent=1 // pred_check_branch
      %23 = sbr.rel (0) target = $region17
    $region16: #{tpu_custom_call.1} parent=1 // pred_region
      _
    $region17: #{tpu_custom_call.1} parent=1 // pred_fallthru
      _
    // Predicated region
    $region18: #{tpu_custom_call.1} parent=1 // pred_check
      _
    $region19: #{tpu_custom_call.1} parent=1 // pred_check_branch
      %25 = sbr.rel (0) target = $region21
    $region20: #{tpu_custom_call.1} parent=1 // pred_region
      _
    $region21: #{tpu_custom_call.1} parent=1 // pred_fallthru
      _
    // Predicated region
    $region22: #{tpu_custom_call.1} parent=1 // pred_check
      _
    $region23: #{tpu_custom_call.1} parent=1 // pred_check_branch
      %27 = sbr.rel (0) target = $region25
    $region24: #{tpu_custom_call.1} parent=1 // pred_region
      _
    $region25: #{tpu_custom_call.1} parent=1 // pred_fallthru
      _
    // Predicated region
    $region26: #{tpu_custom_call.1} parent=1 // pred_check
      _
    $region27: #{tpu_custom_call.1} parent=1 // pred_check_branch
      %29 = sbr.rel (0) target = $region29
    $region28: #{tpu_custom_call.1} parent=1 // pred_region
      _
    $region29: #{tpu_custom_call.1} parent=1 // pred_fallthru
      _
    // Predicated region
    $region30: #{tpu_custom_call.1} parent=1 // pred_check
      _
    $region31: #{tpu_custom_call.1} parent=1 // pred_check_branch
      %31 = sbr.rel (0) target = $region33
    $region32: #{tpu_custom_call.1} parent=1 // pred_region
      _
    $region33: #{tpu_custom_call.1} parent=1 // pred_fallthru
      _
    // Predicated region
    $region34: #{tpu_custom_call.1} parent=1 // pred_check
      _
    $region35: #{tpu_custom_call.1} parent=1 // pred_check_branch
      %33 = sbr.rel (0) target = $region37
    $region36: #{tpu_custom_call.1} parent=1 // pred_region
      _
    $region37: #{tpu_custom_call.1} parent=1 // pred_fallthru
      _
    // Predicated region
    $region38: #{tpu_custom_call.1} parent=1 // pred_check
      _
    $region39: #{tpu_custom_call.1} parent=1 // pred_check_branch
      %35 = sbr.rel (0) target = $region41
    $region40: #{tpu_custom_call.1} parent=1 // pred_region
      _
    $region41: #{tpu_custom_call.1} parent=1 // pred_fallthru
      _
    %v36 = vld [vmem:[%s0] sm:$0xff]
    %v37 = vld [vmem:[%s0 + $0x8] sm:$0xff]
    %v38 = vld [vmem:[%s0 + $0x10] sm:$0xff]
    %v39 = vld [vmem:[%s0 + $0x18] sm:$0xff]
    %v40 = vld [vmem:[%s1] sm:$0xff]
    %v41 = vld [vmem:[%s1 + $0x8] sm:$0xff]
    %v42 = vld [vmem:[%s1 + $0x10] sm:$0xff]
    %v43 = vld [vmem:[%s1 + $0x18] sm:$0xff]
    %v44 = vld [vmem:[%s1 + $0x20] sm:$0xff]
    %v45 = vld [vmem:[%s1 + $0x28] sm:$0xff]
    %v46 = vld [vmem:[%s1 + $0x30] sm:$0xff]
    %v47 = vld [vmem:[%s1 + $0x38] sm:$0xff]
    %v48 = vld [vmem:[%s1 + $0x40] sm:$0xff]
    %v49 = vld [vmem:[%s1 + $0x48] sm:$0xff]
    %v50 = vld [vmem:[%s1 + $0x50] sm:$0xff]
    %v51 = vld [vmem:[%s1 + $0x58] sm:$0xff]
    %v52 = vld [vmem:[%s1 + $0x60] sm:$0xff]
    %v53 = vld [vmem:[%s1 + $0x68] sm:$0xff]
    %v54 = vld [vmem:[%s1 + $0x70] sm:$0xff]
    %v55 = vld [vmem:[%s1 + $0x78] sm:$0xff]
    %v56 = vld [vmem:[%s2] sm:$0xff]
    %v57 = vld [vmem:[%s2 + $0x8] sm:$0xff]
    %v58 = vld [vmem:[%s3] sm:$0x1]
    %v60 = vlaneseq
    %v61 = vshrl.u32 %v60, 7
    %v62 = vsub.s32 0, %v61
    %v63 = vrot.slane %v58, %v62
    %vm65 = vcmask 130048
    %v67 = vsel %vm65, %v36, 0
    %v70 = vsel %vm65, %v37, 0
    %v73 = vsel %vm65, %v38, 0
    %v76 = vsel %vm65, %v39, 0
    %78 = vmatprep.subr.mxu0 0.0
    %79 = vmatpush1.msra.mxu0 %v56
    %80 = vmatprep.subr.mxu0 0.0
    %81 = vmatpush1.msra.mxu0 %v57
    %82 = vmatprep.subr.mxu0 0.0
    %83 = vmatpush1.msra.mxu0 0.0
    %84 = vmatprep.subr.mxu0 0.0
    %85 = vmatpush1.msra.mxu0 0.0
    %86 = vmatprep.subr.mxu0 0.0
    %87 = vmatpush1.msra.mxu0 0.0
    %88 = vmatprep.subr.mxu0 0.0
    %89 = vmatpush1.msra.mxu0 0.0
    %90 = vmatprep.subr.mxu0 0.0
    %91 = vmatpush1.msra.mxu0 0.0
    %92 = vmatprep.subr.mxu0 0.0
    %93 = vmatpush1.msra.mxu0 0.0
    %94 = vmatprep.subr.mxu0 0.0
    %95 = vmatpush1.msra.mxu0 0.0
    %96 = vmatprep.subr.mxu0 0.0
    %97 = vmatpush1.msra.mxu0 0.0
    %98 = vmatprep.subr.mxu0 0.0
    %99 = vmatpush1.msra.mxu0 0.0
    %100 = vmatprep.subr.mxu0 0.0
    %101 = vmatpush1.msra.mxu0 0.0
    %102 = vmatprep.subr.mxu0 0.0
    %103 = vmatpush1.msra.mxu0 0.0
    %104 = vmatprep.subr.mxu0 0.0
    %105 = vmatpush1.msra.mxu0 0.0
    %106 = vmatprep.subr.mxu0 0.0
    %107 = vmatpush1.msra.mxu0 0.0
    %108 = vmatprep.subr.mxu0 0.0
    %109 = vmatpush1.msra.mxu0 0.0
    %110 = vmatprep.subr.mxu0 0.0
    %111 = vmatpush1.msra.mxu0 0.0
    %112 = vmatprep.subr.mxu0 0.0
    %113 = vmatpush1.msra.mxu0 0.0
    %114 = vmatprep.subr.mxu0 0.0
    %115 = vmatpush1.msra.mxu0 0.0
    %116 = vmatprep.subr.mxu0 0.0
    %117 = vmatpush1.msra.mxu0 0.0
    %118 = vmatprep.subr.mxu0 0.0
    %119 = vmatpush1.msra.mxu0 0.0
    %120 = vmatprep.subr.mxu0 0.0
    %121 = vmatpush1.msra.mxu0 0.0
    %122 = vmatprep.subr.mxu0 0.0
    %123 = vmatpush1.msra.mxu0 0.0
    %124 = vmatprep.subr.mxu0 0.0
    %125 = vmatpush1.msra.mxu0 0.0
    %126 = vmatprep.subr.mxu0 0.0
    %127 = vmatpush1.msra.mxu0 0.0
    %128 = vmatprep.subr.mxu0 0.0
    %129 = vmatpush1.msra.mxu0 0.0
    %130 = vmatprep.subr.mxu0 0.0
    %131 = vmatpush1.msra.mxu0 0.0
    %132 = vmatprep.subr.mxu0 0.0
    %133 = vmatpush1.msra.mxu0 0.0
    %134 = vmatprep.subr.mxu0 0.0
    %135 = vmatpush1.msra.mxu0 0.0
    %136 = vmatprep.subr.mxu0 0.0
    %137 = vmatpush1.msra.mxu0 0.0
    %138 = vmatprep.subr.mxu0 0.0
    %139 = vmatpush1.msra.mxu0 0.0
    %140 = vmatprep.subr.mxu0 0.0
    %141 = vmatpush1.msra.mxu0 0.0
    %142 = vmatprep.mubr.f32.mxu0 0.0
    %143 = vmatmul.mubr.f32.gmra.mrb[0].mxu0 %v67
    %v144 = vpop.f32.mrb[0].mxu0
    %v145 = vadd.f32 %v63, %v144
    %v146 = vpop.f32.mrb[0].mxu0
    %147 = vmatprep.mubr.f32.mxu0 0.0
    %148 = vmatmul.mubr.f32.gmra.mrb[0].mxu0 %v70
    %v149 = vpop.f32.mrb[0].mxu0
    %v150 = vadd.f32 %v63, %v149
    %v151 = vpop.f32.mrb[0].mxu0
    %152 = vmatprep.mubr.f32.mxu0 0.0
    %153 = vmatmul.mubr.f32.gmra.mrb[0].mxu0 %v73
    %v154 = vpop.f32.mrb[0].mxu0
    %v155 = vadd.f32 %v63, %v154
    %v156 = vpop.f32.mrb[0].mxu0
    %157 = vmatprep.mubr.f32.mxu0 0.0
    %158 = vmatmul.mubr.f32.gmra.mrb[0].mxu0 %v76
    %v159 = vpop.f32.mrb[0].mxu0
    %v160 = vadd.f32 %v63, %v159
    %v161 = vpop.f32.mrb[0].mxu0
    %162 = vdwg.mxu0
    %v163 = vld [vmem:[%s4] sm:$0xff]
    %v164 = vld [vmem:[%s4 + $0x8] sm:$0xff]
    %v165 = vld [vmem:[%s5] sm:$0x1]
    %v167 = vlaneseq
    %v168 = vshrl.u32 %v167, 7
    %v169 = vsub.s32 0, %v168
    %v170 = vrot.slane %v165, %v169
    %172 = vmatprep.subr.mxu0 0.0
    %173 = vmatpush1.msra.mxu0 %v163
    %174 = vmatprep.subr.mxu0 0.0
    %175 = vmatpush1.msra.mxu0 %v164
    %176 = vmatprep.subr.mxu0 0.0
    %177 = vmatpush1.msra.mxu0 0.0
    %178 = vmatprep.subr.mxu0 0.0
    %179 = vmatpush1.msra.mxu0 0.0
    %180 = vmatprep.subr.mxu0 0.0
    %181 = vmatpush1.msra.mxu0 0.0
    %182 = vmatprep.subr.mxu0 0.0
    %183 = vmatpush1.msra.mxu0 0.0
    %184 = vmatprep.subr.mxu0 0.0
    %185 = vmatpush1.msra.mxu0 0.0
    %186 = vmatprep.subr.mxu0 0.0
    %187 = vmatpush1.msra.mxu0 0.0
    %188 = vmatprep.subr.mxu0 0.0
    %189 = vmatpush1.msra.mxu0 0.0
    %190 = vmatprep.subr.mxu0 0.0
    %191 = vmatpush1.msra.mxu0 0.0
    %192 = vmatprep.subr.mxu0 0.0
    %193 = vmatpush1.msra.mxu0 0.0
    %194 = vmatprep.subr.mxu0 0.0
    %195 = vmatpush1.msra.mxu0 0.0
    %196 = vmatprep.subr.mxu0 0.0
    %197 = vmatpush1.msra.mxu0 0.0
    %198 = vmatprep.subr.mxu0 0.0
    %199 = vmatpush1.msra.mxu0 0.0
    %200 = vmatprep.subr.mxu0 0.0
    %201 = vmatpush1.msra.mxu0 0.0
    %202 = vmatprep.subr.mxu0 0.0
    %203 = vmatpush1.msra.mxu0 0.0
    %204 = vmatprep.subr.mxu0 0.0
    %205 = vmatpush1.msra.mxu0 0.0
    %206 = vmatprep.subr.mxu0 0.0
    %207 = vmatpush1.msra.mxu0 0.0
    %208 = vmatprep.subr.mxu0 0.0
    %209 = vmatpush1.msra.mxu0 0.0
    %210 = vmatprep.subr.mxu0 0.0
    %211 = vmatpush1.msra.mxu0 0.0
    %212 = vmatprep.subr.mxu0 0.0
    %213 = vmatpush1.msra.mxu0 0.0
    %214 = vmatprep.subr.mxu0 0.0
    %215 = vmatpush1.msra.mxu0 0.0
    %216 = vmatprep.subr.mxu0 0.0
    %217 = vmatpush1.msra.mxu0 0.0
    %218 = vmatprep.subr.mxu0 0.0
    %219 = vmatpush1.msra.mxu0 0.0
    %220 = vmatprep.subr.mxu0 0.0
    %221 = vmatpush1.msra.mxu0 0.0
    %222 = vmatprep.subr.mxu0 0.0
    %223 = vmatpush1.msra.mxu0 0.0
    %224 = vmatprep.subr.mxu0 0.0
    %225 = vmatpush1.msra.mxu0 0.0
    %226 = vmatprep.subr.mxu0 0.0
    %227 = vmatpush1.msra.mxu0 0.0
    %228 = vmatprep.subr.mxu0 0.0
    %229 = vmatpush1.msra.mxu0 0.0
    %230 = vmatprep.subr.mxu0 0.0
    %231 = vmatpush1.msra.mxu0 0.0
    %232 = vmatprep.subr.mxu0 0.0
    %233 = vmatpush1.msra.mxu0 0.0
    %234 = vmatprep.subr.mxu0 0.0
    %235 = vmatpush1.msra.mxu0 0.0
    %236 = vmatprep.mubr.f32.mxu0 0.0
    %237 = vmatmul.mubr.f32.gmra.mrb[0].mxu0 %v67
    %v238 = vpop.f32.mrb[0].mxu0
    %v239 = vadd.f32 %v170, %v238
    %v240 = vpop.f32.mrb[0].mxu0
    %241 = vmatprep.mubr.f32.mxu0 0.0
    %242 = vmatmul.mubr.f32.gmra.mrb[0].mxu0 %v70
    %v243 = vpop.f32.mrb[0].mxu0
    %v244 = vadd.f32 %v170, %v243
    %v245 = vpop.f32.mrb[0].mxu0
    %246 = vmatprep.mubr.f32.mxu0 0.0
    %247 = vmatmul.mubr.f32.gmra.mrb[0].mxu0 %v73
    %v248 = vpop.f32.mrb[0].mxu0
    %v249 = vadd.f32 %v170, %v248
    %v250 = vpop.f32.mrb[0].mxu0
    %251 = vmatprep.mubr.f32.mxu0 0.0
    %252 = vmatmul.mubr.f32.gmra.mrb[0].mxu0 %v76
    %v253 = vpop.f32.mrb[0].mxu0
    %v254 = vadd.f32 %v170, %v253
    %v255 = vpop.f32.mrb[0].mxu0
    %256 = vdwg.mxu0
    %v257 = vld [vmem:[%s6] sm:$0xff]
    %v258 = vld [vmem:[%s6 + $0x8] sm:$0xff]
    %v259 = vld [vmem:[%s7] sm:$0x1]
    %v261 = vlaneseq
    %v262 = vshrl.u32 %v261, 7
    %v263 = vsub.s32 0, %v262
    %v264 = vrot.slane %v259, %v263
    %v267 = vsel %vm65, %v40, 0
    %v270 = vsel %vm65, %v41, 0
    %v273 = vsel %vm65, %v42, 0
    %v276 = vsel %vm65, %v43, 0
    %v279 = vsel %vm65, %v44, 0
    %v282 = vsel %vm65, %v45, 0
    %v285 = vsel %vm65, %v46, 0
    %v288 = vsel %vm65, %v47, 0
    %v291 = vsel %vm65, %v48, 0
    %v294 = vsel %vm65, %v49, 0
    %v297 = vsel %vm65, %v50, 0
    %v300 = vsel %vm65, %v51, 0
    %v303 = vsel %vm65, %v52, 0
    %v306 = vsel %vm65, %v53, 0
    %v309 = vsel %vm65, %v54, 0
    %v312 = vsel %vm65, %v55, 0
    %314 = vmatprep.subr.mxu0 0.0
    %315 = vmatpush1.msra.mxu0 %v257
    %316 = vmatprep.subr.mxu0 0.0
    %317 = vmatpush1.msra.mxu0 %v258
    %318 = vmatprep.subr.mxu0 0.0
    %319 = vmatpush1.msra.mxu0 0.0
    %320 = vmatprep.subr.mxu0 0.0
    %321 = vmatpush1.msra.mxu0 0.0
    %322 = vmatprep.subr.mxu0 0.0
    %323 = vmatpush1.msra.mxu0 0.0
    %324 = vmatprep.subr.mxu0 0.0
    %325 = vmatpush1.msra.mxu0 0.0
    %326 = vmatprep.subr.mxu0 0.0
    %327 = vmatpush1.msra.mxu0 0.0
    %328 = vmatprep.subr.mxu0 0.0
    %329 = vmatpush1.msra.mxu0 0.0
    %330 = vmatprep.subr.mxu0 0.0
    %331 = vmatpush1.msra.mxu0 0.0
    %332 = vmatprep.subr.mxu0 0.0
    %333 = vmatpush1.msra.mxu0 0.0
    %334 = vmatprep.subr.mxu0 0.0
    %335 = vmatpush1.msra.mxu0 0.0
    %336 = vmatprep.subr.mxu0 0.0
    %337 = vmatpush1.msra.mxu0 0.0
    %338 = vmatprep.subr.mxu0 0.0
    %339 = vmatpush1.msra.mxu0 0.0
    %340 = vmatprep.subr.mxu0 0.0
    %341 = vmatpush1.msra.mxu0 0.0
    %342 = vmatprep.subr.mxu0 0.0
    %343 = vmatpush1.msra.mxu0 0.0
    %344 = vmatprep.subr.mxu0 0.0
    %345 = vmatpush1.msra.mxu0 0.0
    %346 = vmatprep.subr.mxu0 0.0
    %347 = vmatpush1.msra.mxu0 0.0
    %348 = vmatprep.subr.mxu0 0.0
    %349 = vmatpush1.msra.mxu0 0.0
    %350 = vmatprep.subr.mxu0 0.0
    %351 = vmatpush1.msra.mxu0 0.0
    %352 = vmatprep.subr.mxu0 0.0
    %353 = vmatpush1.msra.mxu0 0.0
    %354 = vmatprep.subr.mxu0 0.0
    %355 = vmatpush1.msra.mxu0 0.0
    %356 = vmatprep.subr.mxu0 0.0
    %357 = vmatpush1.msra.mxu0 0.0
    %358 = vmatprep.subr.mxu0 0.0
    %359 = vmatpush1.msra.mxu0 0.0
    %360 = vmatprep.subr.mxu0 0.0
    %361 = vmatpush1.msra.mxu0 0.0
    %362 = vmatprep.subr.mxu0 0.0
    %363 = vmatpush1.msra.mxu0 0.0
    %364 = vmatprep.subr.mxu0 0.0
    %365 = vmatpush1.msra.mxu0 0.0
    %366 = vmatprep.subr.mxu0 0.0
    %367 = vmatpush1.msra.mxu0 0.0
    %368 = vmatprep.subr.mxu0 0.0
    %369 = vmatpush1.msra.mxu0 0.0
    %370 = vmatprep.subr.mxu0 0.0
    %371 = vmatpush1.msra.mxu0 0.0
    %372 = vmatprep.subr.mxu0 0.0
    %373 = vmatpush1.msra.mxu0 0.0
    %374 = vmatprep.subr.mxu0 0.0
    %375 = vmatpush1.msra.mxu0 0.0
    %376 = vmatprep.subr.mxu0 0.0
    %377 = vmatpush1.msra.mxu0 0.0
    %378 = vmatprep.mubr.f32.mxu0 0.0
    %379 = vmatmul.mubr.f32.gmra.mrb[0].mxu0 %v267
    %v380 = vpop.f32.mrb[0].mxu0
    %v381 = vadd.f32 %v264, %v380
    %v382 = vpop.f32.mrb[0].mxu0
    %383 = vmatprep.mubr.f32.mxu0 0.0
    %384 = vmatmul.mubr.f32.gmra.mrb[0].mxu0 %v270
    %v385 = vpop.f32.mrb[0].mxu0
    %v386 = vadd.f32 %v264, %v385
    %v387 = vpop.f32.mrb[0].mxu0
    %388 = vmatprep.mubr.f32.mxu0 0.0
    %389 = vmatmul.mubr.f32.gmra.mrb[0].mxu0 %v273
    %v390 = vpop.f32.mrb[0].mxu0
    %v391 = vadd.f32 %v264, %v390
    %v392 = vpop.f32.mrb[0].mxu0
    %393 = vmatprep.mubr.f32.mxu0 0.0
    %394 = vmatmul.mubr.f32.gmra.mrb[0].mxu0 %v276
    %v395 = vpop.f32.mrb[0].mxu0
    %v396 = vadd.f32 %v264, %v395
    %v397 = vpop.f32.mrb[0].mxu0
    %398 = vmatprep.mubr.f32.mxu0 0.0
    %399 = vmatmul.mubr.f32.gmra.mrb[0].mxu0 %v279
    %v400 = vpop.f32.mrb[0].mxu0
    %v401 = vadd.f32 %v264, %v400
    %v402 = vpop.f32.mrb[0].mxu0
    %403 = vmatprep.mubr.f32.mxu0 0.0
    %404 = vmatmul.mubr.f32.gmra.mrb[0].mxu0 %v282
    %v405 = vpop.f32.mrb[0].mxu0
    %v406 = vadd.f32 %v264, %v405
    %v407 = vpop.f32.mrb[0].mxu0
    %408 = vmatprep.mubr.f32.mxu0 0.0
    %409 = vmatmul.mubr.f32.gmra.mrb[0].mxu0 %v285
    %v410 = vpop.f32.mrb[0].mxu0
    %v411 = vadd.f32 %v264, %v410
    %v412 = vpop.f32.mrb[0].mxu0
    %413 = vmatprep.mubr.f32.mxu0 0.0
    %414 = vmatmul.mubr.f32.gmra.mrb[0].mxu0 %v288
    %v415 = vpop.f32.mrb[0].mxu0
    %v416 = vadd.f32 %v264, %v415
    %v417 = vpop.f32.mrb[0].mxu0
    %418 = vmatprep.mubr.f32.mxu0 0.0
    %419 = vmatmul.mubr.f32.gmra.mrb[0].mxu0 %v291
    %v420 = vpop.f32.mrb[0].mxu0
    %v421 = vadd.f32 %v264, %v420
    %v422 = vpop.f32.mrb[0].mxu0
    %423 = vmatprep.mubr.f32.mxu0 0.0
    %424 = vmatmul.mubr.f32.gmra.mrb[0].mxu0 %v294
    %v425 = vpop.f32.mrb[0].mxu0
    %v426 = vadd.f32 %v264, %v425
    %v427 = vpop.f32.mrb[0].mxu0
    %428 = vmatprep.mubr.f32.mxu0 0.0
    %429 = vmatmul.mubr.f32.gmra.mrb[0].mxu0 %v297
    %v430 = vpop.f32.mrb[0].mxu0
    %v431 = vadd.f32 %v264, %v430
    %v432 = vpop.f32.mrb[0].mxu0
    %433 = vmatprep.mubr.f32.mxu0 0.0
    %434 = vmatmul.mubr.f32.gmra.mrb[0].mxu0 %v300
    %v435 = vpop.f32.mrb[0].mxu0
    %v436 = vadd.f32 %v264, %v435
    %v437 = vpop.f32.mrb[0].mxu0
    %438 = vmatprep.mubr.f32.mxu0 0.0
    %439 = vmatmul.mubr.f32.gmra.mrb[0].mxu0 %v303
    %v440 = vpop.f32.mrb[0].mxu0
    %v441 = vadd.f32 %v264, %v440
    %v442 = vpop.f32.mrb[0].mxu0
    %443 = vmatprep.mubr.f32.mxu0 0.0
    %444 = vmatmul.mubr.f32.gmra.mrb[0].mxu0 %v306
    %v445 = vpop.f32.mrb[0].mxu0
    %v446 = vadd.f32 %v264, %v445
    %v447 = vpop.f32.mrb[0].mxu0
    %448 = vmatprep.mubr.f32.mxu0 0.0
    %449 = vmatmul.mubr.f32.gmra.mrb[0].mxu0 %v309
    %v450 = vpop.f32.mrb[0].mxu0
    %v451 = vadd.f32 %v264, %v450
    %v452 = vpop.f32.mrb[0].mxu0
    %453 = vmatprep.mubr.f32.mxu0 0.0
    %454 = vmatmul.mubr.f32.gmra.mrb[0].mxu0 %v312
    %v455 = vpop.f32.mrb[0].mxu0
    %v456 = vadd.f32 %v264, %v455
    %v457 = vpop.f32.mrb[0].mxu0
    %458 = vdwg.mxu0
    %vm459 = vcmask 261120
    %v461 = vsel %vm459, %v381, 0
    %v464 = vsel %vm459, %v386, 0
    %v467 = vsel %vm459, %v391, 0
    %v470 = vsel %vm459, %v396, 0
    %v473 = vsel %vm459, %v401, 0
    %v476 = vsel %vm459, %v406, 0
    %v479 = vsel %vm459, %v411, 0
    %v482 = vsel %vm459, %v416, 0
    %v485 = vsel %vm459, %v145, 0
    %v488 = vsel %vm459, %v150, 0
    %490 = vmatprep.subr.mxu0 0.0
    %491 = vmatpush1.xpose.msra.mxu0 %v485
    %492 = vmatprep.subr.mxu0 0.0
    %493 = vmatpush1.xpose.msra.mxu0 %v488
    %494 = vmatprep.subr.mxu0 0.0
    %495 = vmatpush1.xpose.msra.mxu0 0.0
    %496 = vmatprep.subr.mxu0 0.0
    %497 = vmatpush1.xpose.msra.mxu0 0.0
    %498 = vmatprep.subr.mxu0 0.0
    %499 = vmatpush1.xpose.msra.mxu0 0.0
    %500 = vmatprep.subr.mxu0 0.0
    %501 = vmatpush1.xpose.msra.mxu0 0.0
    %502 = vmatprep.subr.mxu0 0.0
    %503 = vmatpush1.xpose.msra.mxu0 0.0
    %504 = vmatprep.subr.mxu0 0.0
    %505 = vmatpush1.xpose.msra.mxu0 0.0
    %506 = vmatprep.subr.mxu0 0.0
    %507 = vmatpush1.xpose.msra.mxu0 0.0
    %508 = vmatprep.subr.mxu0 0.0
    %509 = vmatpush1.xpose.msra.mxu0 0.0
    %510 = vmatprep.subr.mxu0 0.0
    %511 = vmatpush1.xpose.msra.mxu0 0.0
    %512 = vmatprep.subr.mxu0 0.0
    %513 = vmatpush1.xpose.msra.mxu0 0.0
    %514 = vmatprep.subr.mxu0 0.0
    %515 = vmatpush1.xpose.msra.mxu0 0.0
    %516 = vmatprep.subr.mxu0 0.0
    %517 = vmatpush1.xpose.msra.mxu0 0.0
    %518 = vmatprep.subr.mxu0 0.0
    %519 = vmatpush1.xpose.msra.mxu0 0.0
    %520 = vmatprep.subr.mxu0 0.0
    %521 = vmatpush1.xpose.msra.mxu0 0.0
    %522 = vmatprep.subr.mxu0 0.0
    %523 = vmatpush1.xpose.msra.mxu0 0.0
    %524 = vmatprep.subr.mxu0 0.0
    %525 = vmatpush1.xpose.msra.mxu0 0.0
    %526 = vmatprep.subr.mxu0 0.0
    %527 = vmatpush1.xpose.msra.mxu0 0.0
    %528 = vmatprep.subr.mxu0 0.0
    %529 = vmatpush1.xpose.msra.mxu0 0.0
    %530 = vmatprep.subr.mxu0 0.0
    %531 = vmatpush1.xpose.msra.mxu0 0.0
    %532 = vmatprep.subr.mxu0 0.0
    %533 = vmatpush1.xpose.msra.mxu0 0.0
    %534 = vmatprep.subr.mxu0 0.0
    %535 = vmatpush1.xpose.msra.mxu0 0.0
    %536 = vmatprep.subr.mxu0 0.0
    %537 = vmatpush1.xpose.msra.mxu0 0.0
    %538 = vmatprep.subr.mxu0 0.0
    %539 = vmatpush1.xpose.msra.mxu0 0.0
    %540 = vmatprep.subr.mxu0 0.0
    %541 = vmatpush1.xpose.msra.mxu0 0.0
    %542 = vmatprep.subr.mxu0 0.0
    %543 = vmatpush1.xpose.msra.mxu0 0.0
    %544 = vmatprep.subr.mxu0 0.0
    %545 = vmatpush1.xpose.msra.mxu0 0.0
    %546 = vmatprep.subr.mxu0 0.0
    %547 = vmatpush1.xpose.msra.mxu0 0.0
    %548 = vmatprep.subr.mxu0 0.0
    %549 = vmatpush1.xpose.msra.mxu0 0.0
    %550 = vmatprep.subr.mxu0 0.0
    %551 = vmatpush1.xpose.msra.mxu0 0.0
    %552 = vmatprep.subr.mxu0 0.0
    %553 = vmatpush1.xpose.msra.mxu0 0.0
    %554 = vmatprep.mubr.f32.mxu0 0.0
    %555 = vmatmul.mubr.f32.gmra.mrb[0].mxu0 %v461
    %v556 = vpop.f32.mrb[0].mxu0
    %v557 = vadd.f32 0.0, %v556
    %v558 = vpop.f32.mrb[0].mxu0
    %559 = vmatprep.mubr.f32.mxu0 0.0
    %560 = vmatmul.mubr.f32.gmra.mrb[0].mxu0 %v464
    %v561 = vpop.f32.mrb[0].mxu0
    %v562 = vadd.f32 0.0, %v561
    %v563 = vpop.f32.mrb[0].mxu0
    %564 = vmatprep.mubr.f32.mxu0 0.0
    %565 = vmatmul.mubr.f32.gmra.mrb[0].mxu0 %v467
    %v566 = vpop.f32.mrb[0].mxu0
    %v567 = vadd.f32 0.0, %v566
    %v568 = vpop.f32.mrb[0].mxu0
    %569 = vmatprep.mubr.f32.mxu0 0.0
    %570 = vmatmul.mubr.f32.gmra.mrb[0].mxu0 %v470
    %v571 = vpop.f32.mrb[0].mxu0
    %v572 = vadd.f32 0.0, %v571
    %v573 = vpop.f32.mrb[0].mxu0
    %574 = vmatprep.mubr.f32.mxu0 0.0
    %575 = vmatmul.mubr.f32.gmra.mrb[0].mxu0 %v473
    %v576 = vpop.f32.mrb[0].mxu0
    %v577 = vadd.f32 0.0, %v576
    %v578 = vpop.f32.mrb[0].mxu0
    %579 = vmatprep.mubr.f32.mxu0 0.0
    %580 = vmatmul.mubr.f32.gmra.mrb[0].mxu0 %v476
    %v581 = vpop.f32.mrb[0].mxu0
    %v582 = vadd.f32 0.0, %v581
    %v583 = vpop.f32.mrb[0].mxu0
    %584 = vmatprep.mubr.f32.mxu0 0.0
    %585 = vmatmul.mubr.f32.gmra.mrb[0].mxu0 %v479
    %v586 = vpop.f32.mrb[0].mxu0
    %v587 = vadd.f32 0.0, %v586
    %v588 = vpop.f32.mrb[0].mxu0
    %589 = vmatprep.mubr.f32.mxu0 0.0
    %590 = vmatmul.mubr.f32.gmra.mrb[0].mxu0 %v482
    %v591 = vpop.f32.mrb[0].mxu0
    %v592 = vadd.f32 0.0, %v591
    %v593 = vpop.f32.mrb[0].mxu0
    %594 = vdwg.mxu0
    %v596 = vsel %vm459, %v421, 0
    %v599 = vsel %vm459, %v426, 0
    %v602 = vsel %vm459, %v431, 0
    %v605 = vsel %vm459, %v436, 0
    %v608 = vsel %vm459, %v441, 0
    %v611 = vsel %vm459, %v446, 0
    %v614 = vsel %vm459, %v451, 0
    %v617 = vsel %vm459, %v456, 0
    %v620 = vsel %vm459, %v155, 0
    %v623 = vsel %vm459, %v160, 0
    %625 = vmatprep.subr.mxu0 0.0
    %626 = vmatpush1.xpose.msra.mxu0 %v620
    %627 = vmatprep.subr.mxu0 0.0
    %628 = vmatpush1.xpose.msra.mxu0 %v623
    %629 = vmatprep.subr.mxu0 0.0
    %630 = vmatpush1.xpose.msra.mxu0 0.0
    %631 = vmatprep.subr.mxu0 0.0
    %632 = vmatpush1.xpose.msra.mxu0 0.0
    %633 = vmatprep.subr.mxu0 0.0
    %634 = vmatpush1.xpose.msra.mxu0 0.0
    %635 = vmatprep.subr.mxu0 0.0
    %636 = vmatpush1.xpose.msra.mxu0 0.0
    %637 = vmatprep.subr.mxu0 0.0
    %638 = vmatpush1.xpose.msra.mxu0 0.0
    %639 = vmatprep.subr.mxu0 0.0
    %640 = vmatpush1.xpose.msra.mxu0 0.0
    %641 = vmatprep.subr.mxu0 0.0
    %642 = vmatpush1.xpose.msra.mxu0 0.0
    %643 = vmatprep.subr.mxu0 0.0
    %644 = vmatpush1.xpose.msra.mxu0 0.0
    %645 = vmatprep.subr.mxu0 0.0
    %646 = vmatpush1.xpose.msra.mxu0 0.0
    %647 = vmatprep.subr.mxu0 0.0
    %648 = vmatpush1.xpose.msra.mxu0 0.0
    %649 = vmatprep.subr.mxu0 0.0
    %650 = vmatpush1.xpose.msra.mxu0 0.0
    %651 = vmatprep.subr.mxu0 0.0
    %652 = vmatpush1.xpose.msra.mxu0 0.0
    %653 = vmatprep.subr.mxu0 0.0
    %654 = vmatpush1.xpose.msra.mxu0 0.0
    %655 = vmatprep.subr.mxu0 0.0
    %656 = vmatpush1.xpose.msra.mxu0 0.0
    %657 = vmatprep.subr.mxu0 0.0
    %658 = vmatpush1.xpose.msra.mxu0 0.0
    %659 = vmatprep.subr.mxu0 0.0
    %660 = vmatpush1.xpose.msra.mxu0 0.0
    %661 = vmatprep.subr.mxu0 0.0
    %662 = vmatpush1.xpose.msra.mxu0 0.0
    %663 = vmatprep.subr.mxu0 0.0
    %664 = vmatpush1.xpose.msra.mxu0 0.0
    %665 = vmatprep.subr.mxu0 0.0
    %666 = vmatpush1.xpose.msra.mxu0 0.0
    %667 = vmatprep.subr.mxu0 0.0
    %668 = vmatpush1.xpose.msra.mxu0 0.0
    %669 = vmatprep.subr.mxu0 0.0
    %670 = vmatpush1.xpose.msra.mxu0 0.0
    %671 = vmatprep.subr.mxu0 0.0
    %672 = vmatpush1.xpose.msra.mxu0 0.0
    %673 = vmatprep.subr.mxu0 0.0
    %674 = vmatpush1.xpose.msra.mxu0 0.0
    %675 = vmatprep.subr.mxu0 0.0
    %676 = vmatpush1.xpose.msra.mxu0 0.0
    %677 = vmatprep.subr.mxu0 0.0
    %678 = vmatpush1.xpose.msra.mxu0 0.0
    %679 = vmatprep.subr.mxu0 0.0
    %680 = vmatpush1.xpose.msra.mxu0 0.0
    %681 = vmatprep.subr.mxu0 0.0
    %682 = vmatpush1.xpose.msra.mxu0 0.0
    %683 = vmatprep.subr.mxu0 0.0
    %684 = vmatpush1.xpose.msra.mxu0 0.0
    %685 = vmatprep.subr.mxu0 0.0
    %686 = vmatpush1.xpose.msra.mxu0 0.0
    %687 = vmatprep.subr.mxu0 0.0
    %688 = vmatpush1.xpose.msra.mxu0 0.0
    %689 = vmatprep.mubr.f32.mxu0 0.0
    %690 = vmatmul.mubr.f32.gmra.mrb[0].mxu0 %v596
    %v691 = vpop.f32.mrb[0].mxu0
    %v692 = vadd.f32 0.0, %v691
    %v693 = vpop.f32.mrb[0].mxu0
    %694 = vmatprep.mubr.f32.mxu0 0.0
    %695 = vmatmul.mubr.f32.gmra.mrb[0].mxu0 %v599
    %v696 = vpop.f32.mrb[0].mxu0
    %v697 = vadd.f32 0.0, %v696
    %v698 = vpop.f32.mrb[0].mxu0
    %699 = vmatprep.mubr.f32.mxu0 0.0
    %700 = vmatmul.mubr.f32.gmra.mrb[0].mxu0 %v602
    %v701 = vpop.f32.mrb[0].mxu0
    %v702 = vadd.f32 0.0, %v701
    %v703 = vpop.f32.mrb[0].mxu0
    %704 = vmatprep.mubr.f32.mxu0 0.0
    %705 = vmatmul.mubr.f32.gmra.mrb[0].mxu0 %v605
    %v706 = vpop.f32.mrb[0].mxu0
    %v707 = vadd.f32 0.0, %v706
    %v708 = vpop.f32.mrb[0].mxu0
    %709 = vmatprep.mubr.f32.mxu0 0.0
    %710 = vmatmul.mubr.f32.gmra.mrb[0].mxu0 %v608
    %v711 = vpop.f32.mrb[0].mxu0
    %v712 = vadd.f32 0.0, %v711
    %v713 = vpop.f32.mrb[0].mxu0
    %714 = vmatprep.mubr.f32.mxu0 0.0
    %715 = vmatmul.mubr.f32.gmra.mrb[0].mxu0 %v611
    %v716 = vpop.f32.mrb[0].mxu0
    %v717 = vadd.f32 0.0, %v716
    %v718 = vpop.f32.mrb[0].mxu0
    %719 = vmatprep.mubr.f32.mxu0 0.0
    %720 = vmatmul.mubr.f32.gmra.mrb[0].mxu0 %v614
    %v721 = vpop.f32.mrb[0].mxu0
    %v722 = vadd.f32 0.0, %v721
    %v723 = vpop.f32.mrb[0].mxu0
    %724 = vmatprep.mubr.f32.mxu0 0.0
    %725 = vmatmul.mubr.f32.gmra.mrb[0].mxu0 %v617
    %v726 = vpop.f32.mrb[0].mxu0
    %v727 = vadd.f32 0.0, %v726
    %v728 = vpop.f32.mrb[0].mxu0
    %729 = vdwg.mxu0
    %v730 = vsel %vm65, %v557, -inf
    %731 = vmax.xlane.f32.xlu0 %v730
    %v732 = vpop.xlane.xlu0 %731
    %v733 = vsel %vm65, %v562, -inf
    %734 = vmax.xlane.f32.xlu0 %v733
    %v735 = vpop.xlane.xlu0 %734
    %v736 = vsel %vm65, %v567, -inf
    %737 = vmax.xlane.f32.xlu0 %v736
    %v738 = vpop.xlane.xlu0 %737
    %v739 = vsel %vm65, %v572, -inf
    %740 = vmax.xlane.f32.xlu0 %v739
    %v741 = vpop.xlane.xlu0 %740
    %v742 = vsel %vm65, %v577, -inf
    %743 = vmax.xlane.f32.xlu0 %v742
    %v744 = vpop.xlane.xlu0 %743
    %v745 = vsel %vm65, %v582, -inf
    %746 = vmax.xlane.f32.xlu0 %v745
    %v747 = vpop.xlane.xlu0 %746
    %v748 = vsel %vm65, %v587, -inf
    %749 = vmax.xlane.f32.xlu0 %v748
    %v750 = vpop.xlane.xlu0 %749
    %v751 = vsel %vm65, %v592, -inf
    %752 = vmax.xlane.f32.xlu0 %v751
    %v753 = vpop.xlane.xlu0 %752
    %v754 = vsel %vm65, %v692, -inf
    %755 = vmax.xlane.f32.xlu0 %v754
    %v756 = vpop.xlane.xlu0 %755
    %v757 = vsel %vm65, %v697, -inf
    %758 = vmax.xlane.f32.xlu0 %v757
    %v759 = vpop.xlane.xlu0 %758
    %v760 = vsel %vm65, %v702, -inf
    %761 = vmax.xlane.f32.xlu0 %v760
    %v762 = vpop.xlane.xlu0 %761
    %v763 = vsel %vm65, %v707, -inf
    %764 = vmax.xlane.f32.xlu0 %v763
    %v765 = vpop.xlane.xlu0 %764
    %v766 = vsel %vm65, %v712, -inf
    %767 = vmax.xlane.f32.xlu0 %v766
    %v768 = vpop.xlane.xlu0 %767
    %v769 = vsel %vm65, %v717, -inf
    %770 = vmax.xlane.f32.xlu0 %v769
    %v771 = vpop.xlane.xlu0 %770
    %v772 = vsel %vm65, %v722, -inf
    %773 = vmax.xlane.f32.xlu0 %v772
    %v774 = vpop.xlane.xlu0 %773
    %v775 = vsel %vm65, %v727, -inf
    %776 = vmax.xlane.f32.xlu0 %v775
    %v777 = vpop.xlane.xlu0 %776
    %v778 = vsub.f32 %v557, %v732
    %v779 = vsub.f32 %v562, %v735
    %v780 = vsub.f32 %v567, %v738
    %v781 = vsub.f32 %v572, %v741
    %v782 = vsub.f32 %v577, %v744
    %v783 = vsub.f32 %v582, %v747
    %v784 = vsub.f32 %v587, %v750
    %v785 = vsub.f32 %v592, %v753
    %v786 = vsub.f32 %v692, %v756
    %v787 = vsub.f32 %v697, %v759
    %v788 = vsub.f32 %v702, %v762
    %v789 = vsub.f32 %v707, %v765
    %v790 = vsub.f32 %v712, %v768
    %v791 = vsub.f32 %v717, %v771
    %v792 = vsub.f32 %v722, %v774
    %v793 = vsub.f32 %v727, %v777
    %v794 = vmul.f32 %v778, 1.442695
    %v795 = vpow.pop %v794
    %v796 = vmul.f32 %v779, 1.442695
    %v797 = vpow.pop %v796
    %v798 = vmul.f32 %v780, 1.442695
    %v799 = vpow.pop %v798
    %v800 = vmul.f32 %v781, 1.442695
    %v801 = vpow.pop %v800
    %v802 = vmul.f32 %v782, 1.442695
    %v803 = vpow.pop %v802
    %v804 = vmul.f32 %v783, 1.442695
    %v805 = vpow.pop %v804
    %v806 = vmul.f32 %v784, 1.442695
    %v807 = vpow.pop %v806
    %v808 = vmul.f32 %v785, 1.442695
    %v809 = vpow.pop %v808
    %v810 = vmul.f32 %v786, 1.442695
    %v811 = vpow.pop %v810
    %v812 = vmul.f32 %v787, 1.442695
    %v813 = vpow.pop %v812
    %v814 = vmul.f32 %v788, 1.442695
    %v815 = vpow.pop %v814
    %v816 = vmul.f32 %v789, 1.442695
    %v817 = vpow.pop %v816
    %v818 = vmul.f32 %v790, 1.442695
    %v819 = vpow.pop %v818
    %v820 = vmul.f32 %v791, 1.442695
    %v821 = vpow.pop %v820
    %v822 = vmul.f32 %v792, 1.442695
    %v823 = vpow.pop %v822
    %v824 = vmul.f32 %v793, 1.442695
    %v825 = vpow.pop %v824
    %v826 = vsel %vm65, %v795, 0.0
    %827 = vadd.xlane.f32.xlu0 %v826
    %v828 = vpop.xlane.xlu0 %827
    %v829 = vsel %vm65, %v797, 0.0
    %830 = vadd.xlane.f32.xlu0 %v829
    %v831 = vpop.xlane.xlu0 %830
    %v832 = vsel %vm65, %v799, 0.0
    %833 = vadd.xlane.f32.xlu0 %v832
    %v834 = vpop.xlane.xlu0 %833
    %v835 = vsel %vm65, %v801, 0.0
    %836 = vadd.xlane.f32.xlu0 %v835
    %v837 = vpop.xlane.xlu0 %836
    %v838 = vsel %vm65, %v803, 0.0
    %839 = vadd.xlane.f32.xlu0 %v838
    %v840 = vpop.xlane.xlu0 %839
    %v841 = vsel %vm65, %v805, 0.0
    %842 = vadd.xlane.f32.xlu0 %v841
    %v843 = vpop.xlane.xlu0 %842
    %v844 = vsel %vm65, %v807, 0.0
    %845 = vadd.xlane.f32.xlu0 %v844
    %v846 = vpop.xlane.xlu0 %845
    %v847 = vsel %vm65, %v809, 0.0
    %848 = vadd.xlane.f32.xlu0 %v847
    %v849 = vpop.xlane.xlu0 %848
    %v850 = vsel %vm65, %v811, 0.0
    %851 = vadd.xlane.f32.xlu0 %v850
    %v852 = vpop.xlane.xlu0 %851
    %v853 = vsel %vm65, %v813, 0.0
    %854 = vadd.xlane.f32.xlu0 %v853
    %v855 = vpop.xlane.xlu0 %854
    %v856 = vsel %vm65, %v815, 0.0
    %857 = vadd.xlane.f32.xlu0 %v856
    %v858 = vpop.xlane.xlu0 %857
    %v859 = vsel %vm65, %v817, 0.0
    %860 = vadd.xlane.f32.xlu0 %v859
    %v861 = vpop.xlane.xlu0 %860
    %v862 = vsel %vm65, %v819, 0.0
    %863 = vadd.xlane.f32.xlu0 %v862
    %v864 = vpop.xlane.xlu0 %863
    %v865 = vsel %vm65, %v821, 0.0
    %866 = vadd.xlane.f32.xlu0 %v865
    %v867 = vpop.xlane.xlu0 %866
    %v868 = vsel %vm65, %v823, 0.0
    %869 = vadd.xlane.f32.xlu0 %v868
    %v870 = vpop.xlane.xlu0 %869
    %v871 = vsel %vm65, %v825, 0.0
    %872 = vadd.xlane.f32.xlu0 %v871
    %v873 = vpop.xlane.xlu0 %872
    %v874 = vrcp.pop %v828
    %v875 = vrcp.pop %v831
    %v876 = vrcp.pop %v834
    %v877 = vrcp.pop %v837
    %v878 = vrcp.pop %v840
    %v879 = vrcp.pop %v843
    %v880 = vrcp.pop %v846
    %v881 = vrcp.pop %v849
    %v882 = vrcp.pop %v852
    %v883 = vrcp.pop %v855
    %v884 = vrcp.pop %v858
    %v885 = vrcp.pop %v861
    %v886 = vrcp.pop %v864
    %v887 = vrcp.pop %v867
    %v888 = vrcp.pop %v870
    %v889 = vrcp.pop %v873
    %v890 = vmul.f32 %v795, %v874
    %v891 = vmul.f32 %v797, %v875
    %v892 = vmul.f32 %v799, %v876
    %v893 = vmul.f32 %v801, %v877
    %v894 = vmul.f32 %v803, %v878
    %v895 = vmul.f32 %v805, %v879
    %v896 = vmul.f32 %v807, %v880
    %v897 = vmul.f32 %v809, %v881
    %v898 = vmul.f32 %v811, %v882
    %v899 = vmul.f32 %v813, %v883
    %v900 = vmul.f32 %v815, %v884
    %v901 = vmul.f32 %v817, %v885
    %v902 = vmul.f32 %v819, %v886
    %v903 = vmul.f32 %v821, %v887
    %v904 = vmul.f32 %v823, %v888
    %v905 = vmul.f32 %v825, %v889
    %v907 = vsel %vm65, %v890, 0
    %v910 = vsel %vm65, %v891, 0
    %v913 = vsel %vm65, %v892, 0
    %v916 = vsel %vm65, %v893, 0
    %v919 = vsel %vm65, %v894, 0
    %v922 = vsel %vm65, %v895, 0
    %v925 = vsel %vm65, %v896, 0
    %v928 = vsel %vm65, %v897, 0
    %930 = vmatprep.subr.mxu0 0.0
    %931 = vmatpush1.msra.mxu0 %v239
    %932 = vmatprep.subr.mxu0 0.0
    %933 = vmatpush1.msra.mxu0 %v244
    %934 = vmatprep.subr.mxu0 0.0
    %935 = vmatpush1.msra.mxu0 0.0
    %936 = vmatprep.subr.mxu0 0.0
    %937 = vmatpush1.msra.mxu0 0.0
    %938 = vmatprep.subr.mxu0 0.0
    %939 = vmatpush1.msra.mxu0 0.0
    %940 = vmatprep.subr.mxu0 0.0
    %941 = vmatpush1.msra.mxu0 0.0
    %942 = vmatprep.subr.mxu0 0.0
    %943 = vmatpush1.msra.mxu0 0.0
    %944 = vmatprep.subr.mxu0 0.0
    %945 = vmatpush1.msra.mxu0 0.0
    %946 = vmatprep.subr.mxu0 0.0
    %947 = vmatpush1.msra.mxu0 0.0
    %948 = vmatprep.subr.mxu0 0.0
    %949 = vmatpush1.msra.mxu0 0.0
    %950 = vmatprep.subr.mxu0 0.0
    %951 = vmatpush1.msra.mxu0 0.0
    %952 = vmatprep.subr.mxu0 0.0
    %953 = vmatpush1.msra.mxu0 0.0
    %954 = vmatprep.subr.mxu0 0.0
    %955 = vmatpush1.msra.mxu0 0.0
    %956 = vmatprep.subr.mxu0 0.0
    %957 = vmatpush1.msra.mxu0 0.0
    %958 = vmatprep.subr.mxu0 0.0
    %959 = vmatpush1.msra.mxu0 0.0
    %960 = vmatprep.subr.mxu0 0.0
    %961 = vmatpush1.msra.mxu0 0.0
    %962 = vmatprep.subr.mxu0 0.0
    %963 = vmatpush1.msra.mxu0 0.0
    %964 = vmatprep.subr.mxu0 0.0
    %965 = vmatpush1.msra.mxu0 0.0
    %966 = vmatprep.subr.mxu0 0.0
    %967 = vmatpush1.msra.mxu0 0.0
    %968 = vmatprep.subr.mxu0 0.0
    %969 = vmatpush1.msra.mxu0 0.0
    %970 = vmatprep.subr.mxu0 0.0
    %971 = vmatpush1.msra.mxu0 0.0
    %972 = vmatprep.subr.mxu0 0.0
    %973 = vmatpush1.msra.mxu0 0.0
    %974 = vmatprep.subr.mxu0 0.0
    %975 = vmatpush1.msra.mxu0 0.0
    %976 = vmatprep.subr.mxu0 0.0
    %977 = vmatpush1.msra.mxu0 0.0
    %978 = vmatprep.subr.mxu0 0.0
    %979 = vmatpush1.msra.mxu0 0.0
    %980 = vmatprep.subr.mxu0 0.0
    %981 = vmatpush1.msra.mxu0 0.0
    %982 = vmatprep.subr.mxu0 0.0
    %983 = vmatpush1.msra.mxu0 0.0
    %984 = vmatprep.subr.mxu0 0.0
    %985 = vmatpush1.msra.mxu0 0.0
    %986 = vmatprep.subr.mxu0 0.0
    %987 = vmatpush1.msra.mxu0 0.0
    %988 = vmatprep.subr.mxu0 0.0
    %989 = vmatpush1.msra.mxu0 0.0
    %990 = vmatprep.subr.mxu0 0.0
    %991 = vmatpush1.msra.mxu0 0.0
    %992 = vmatprep.subr.mxu0 0.0
    %993 = vmatpush1.msra.mxu0 0.0
    %994 = vmatprep.mubr.f32.mxu0 0.0
    %995 = vmatmul.mubr.f32.gmra.mrb[0].mxu0 %v907
    %v996 = vpop.f32.mrb[0].mxu0
    %v997 = vadd.f32 0.0, %v996
    %v998 = vpop.f32.mrb[0].mxu0
    %999 = vmatprep.mubr.f32.mxu0 0.0
    %1000 = vmatmul.mubr.f32.gmra.mrb[0].mxu0 %v910
    %v1001 = vpop.f32.mrb[0].mxu0
    %v1002 = vadd.f32 0.0, %v1001
    %v1003 = vpop.f32.mrb[0].mxu0
    %1004 = vmatprep.mubr.f32.mxu0 0.0
    %1005 = vmatmul.mubr.f32.gmra.mrb[0].mxu0 %v913
    %v1006 = vpop.f32.mrb[0].mxu0
    %v1007 = vadd.f32 0.0, %v1006
    %v1008 = vpop.f32.mrb[0].mxu0
    %1009 = vmatprep.mubr.f32.mxu0 0.0
    %1010 = vmatmul.mubr.f32.gmra.mrb[0].mxu0 %v916
    %v1011 = vpop.f32.mrb[0].mxu0
    %v1012 = vadd.f32 0.0, %v1011
    %v1013 = vpop.f32.mrb[0].mxu0
    %1014 = vmatprep.mubr.f32.mxu0 0.0
    %1015 = vmatmul.mubr.f32.gmra.mrb[0].mxu0 %v919
    %v1016 = vpop.f32.mrb[0].mxu0
    %v1017 = vadd.f32 0.0, %v1016
    %v1018 = vpop.f32.mrb[0].mxu0
    %1019 = vmatprep.mubr.f32.mxu0 0.0
    %1020 = vmatmul.mubr.f32.gmra.mrb[0].mxu0 %v922
    %v1021 = vpop.f32.mrb[0].mxu0
    %v1022 = vadd.f32 0.0, %v1021
    %v1023 = vpop.f32.mrb[0].mxu0
    %1024 = vmatprep.mubr.f32.mxu0 0.0
    %1025 = vmatmul.mubr.f32.gmra.mrb[0].mxu0 %v925
    %v1026 = vpop.f32.mrb[0].mxu0
    %v1027 = vadd.f32 0.0, %v1026
    %v1028 = vpop.f32.mrb[0].mxu0
    %1029 = vmatprep.mubr.f32.mxu0 0.0
    %1030 = vmatmul.mubr.f32.gmra.mrb[0].mxu0 %v928
    %v1031 = vpop.f32.mrb[0].mxu0
    %v1032 = vadd.f32 0.0, %v1031
    %v1033 = vpop.f32.mrb[0].mxu0
    %1034 = vdwg.mxu0
    %v1036 = vsel %vm65, %v898, 0
    %v1039 = vsel %vm65, %v899, 0
    %v1042 = vsel %vm65, %v900, 0
    %v1045 = vsel %vm65, %v901, 0
    %v1048 = vsel %vm65, %v902, 0
    %v1051 = vsel %vm65, %v903, 0
    %v1054 = vsel %vm65, %v904, 0
    %v1057 = vsel %vm65, %v905, 0
    %1059 = vmatprep.subr.mxu0 0.0
    %1060 = vmatpush1.msra.mxu0 %v249
    %1061 = vmatprep.subr.mxu0 0.0
    %1062 = vmatpush1.msra.mxu0 %v254
    %1063 = vmatprep.subr.mxu0 0.0
    %1064 = vmatpush1.msra.mxu0 0.0
    %1065 = vmatprep.subr.mxu0 0.0
    %1066 = vmatpush1.msra.mxu0 0.0
    %1067 = vmatprep.subr.mxu0 0.0
    %1068 = vmatpush1.msra.mxu0 0.0
    %1069 = vmatprep.subr.mxu0 0.0
    %1070 = vmatpush1.msra.mxu0 0.0
    %1071 = vmatprep.subr.mxu0 0.0
    %1072 = vmatpush1.msra.mxu0 0.0
    %1073 = vmatprep.subr.mxu0 0.0
    %1074 = vmatpush1.msra.mxu0 0.0
    %1075 = vmatprep.subr.mxu0 0.0
    %1076 = vmatpush1.msra.mxu0 0.0
    %1077 = vmatprep.subr.mxu0 0.0
    %1078 = vmatpush1.msra.mxu0 0.0
    %1079 = vmatprep.subr.mxu0 0.0
    %1080 = vmatpush1.msra.mxu0 0.0
    %1081 = vmatprep.subr.mxu0 0.0
    %1082 = vmatpush1.msra.mxu0 0.0
    %1083 = vmatprep.subr.mxu0 0.0
    %1084 = vmatpush1.msra.mxu0 0.0
    %1085 = vmatprep.subr.mxu0 0.0
    %1086 = vmatpush1.msra.mxu0 0.0
    %1087 = vmatprep.subr.mxu0 0.0
    %1088 = vmatpush1.msra.mxu0 0.0
    %1089 = vmatprep.subr.mxu0 0.0
    %1090 = vmatpush1.msra.mxu0 0.0
    %1091 = vmatprep.subr.mxu0 0.0
    %1092 = vmatpush1.msra.mxu0 0.0
    %1093 = vmatprep.subr.mxu0 0.0
    %1094 = vmatpush1.msra.mxu0 0.0
    %1095 = vmatprep.subr.mxu0 0.0
    %1096 = vmatpush1.msra.mxu0 0.0
    %1097 = vmatprep.subr.mxu0 0.0
    %1098 = vmatpush1.msra.mxu0 0.0
    %1099 = vmatprep.subr.mxu0 0.0
    %1100 = vmatpush1.msra.mxu0 0.0
    %1101 = vmatprep.subr.mxu0 0.0
    %1102 = vmatpush1.msra.mxu0 0.0
    %1103 = vmatprep.subr.mxu0 0.0
    %1104 = vmatpush1.msra.mxu0 0.0
    %1105 = vmatprep.subr.mxu0 0.0
    %1106 = vmatpush1.msra.mxu0 0.0
    %1107 = vmatprep.subr.mxu0 0.0
    %1108 = vmatpush1.msra.mxu0 0.0
    %1109 = vmatprep.subr.mxu0 0.0
    %1110 = vmatpush1.msra.mxu0 0.0
    %1111 = vmatprep.subr.mxu0 0.0
    %1112 = vmatpush1.msra.mxu0 0.0
    %1113 = vmatprep.subr.mxu0 0.0
    %1114 = vmatpush1.msra.mxu0 0.0
    %1115 = vmatprep.subr.mxu0 0.0
    %1116 = vmatpush1.msra.mxu0 0.0
    %1117 = vmatprep.subr.mxu0 0.0
    %1118 = vmatpush1.msra.mxu0 0.0
    %1119 = vmatprep.subr.mxu0 0.0
    %1120 = vmatpush1.msra.mxu0 0.0
    %1121 = vmatprep.subr.mxu0 0.0
    %1122 = vmatpush1.msra.mxu0 0.0
    %1123 = vmatprep.mubr.f32.mxu0 0.0
    %1124 = vmatmul.mubr.f32.gmra.mrb[0].mxu0 %v1036
    %v1125 = vpop.f32.mrb[0].mxu0
    %v1126 = vadd.f32 0.0, %v1125
    %v1127 = vpop.f32.mrb[0].mxu0
    %1128 = vmatprep.mubr.f32.mxu0 0.0
    %1129 = vmatmul.mubr.f32.gmra.mrb[0].mxu0 %v1039
    %v1130 = vpop.f32.mrb[0].mxu0
    %v1131 = vadd.f32 0.0, %v1130
    %v1132 = vpop.f32.mrb[0].mxu0
    %1133 = vmatprep.mubr.f32.mxu0 0.0
    %1134 = vmatmul.mubr.f32.gmra.mrb[0].mxu0 %v1042
    %v1135 = vpop.f32.mrb[0].mxu0
    %v1136 = vadd.f32 0.0, %v1135
    %v1137 = vpop.f32.mrb[0].mxu0
    %1138 = vmatprep.mubr.f32.mxu0 0.0
    %1139 = vmatmul.mubr.f32.gmra.mrb[0].mxu0 %v1045
    %v1140 = vpop.f32.mrb[0].mxu0
    %v1141 = vadd.f32 0.0, %v1140
    %v1142 = vpop.f32.mrb[0].mxu0
    %1143 = vmatprep.mubr.f32.mxu0 0.0
    %1144 = vmatmul.mubr.f32.gmra.mrb[0].mxu0 %v1048
    %v1145 = vpop.f32.mrb[0].mxu0
    %v1146 = vadd.f32 0.0, %v1145
    %v1147 = vpop.f32.mrb[0].mxu0
    %1148 = vmatprep.mubr.f32.mxu0 0.0
    %1149 = vmatmul.mubr.f32.gmra.mrb[0].mxu0 %v1051
    %v1150 = vpop.f32.mrb[0].mxu0
    %v1151 = vadd.f32 0.0, %v1150
    %v1152 = vpop.f32.mrb[0].mxu0
    %1153 = vmatprep.mubr.f32.mxu0 0.0
    %1154 = vmatmul.mubr.f32.gmra.mrb[0].mxu0 %v1054
    %v1155 = vpop.f32.mrb[0].mxu0
    %v1156 = vadd.f32 0.0, %v1155
    %v1157 = vpop.f32.mrb[0].mxu0
    %1158 = vmatprep.mubr.f32.mxu0 0.0
    %1159 = vmatmul.mubr.f32.gmra.mrb[0].mxu0 %v1057
    %v1160 = vpop.f32.mrb[0].mxu0
    %v1161 = vadd.f32 0.0, %v1160
    %v1162 = vpop.f32.mrb[0].mxu0
    %1163 = vdwg.mxu0
    %v1164 = vld [vmem:[%s8] sm:$0xff]
    %v1165 = vld [vmem:[%s8 + $0x8] sm:$0xff]
    %v1166 = vld [vmem:[%s8 + $0x10] sm:$0xff]
    %v1167 = vld [vmem:[%s8 + $0x18] sm:$0xff]
    %v1168 = vld [vmem:[%s9] sm:$0x1]
    %v1170 = vlaneseq
    %v1171 = vshrl.u32 %v1170, 7
    %v1172 = vsub.s32 0, %v1171
    %v1173 = vrot.slane %v1168, %v1172
    %v1176 = vsel %vm459, %v997, 0
    %v1179 = vsel %vm459, %v1002, 0
    %v1182 = vsel %vm459, %v1007, 0
    %v1185 = vsel %vm459, %v1012, 0
    %v1188 = vsel %vm459, %v1017, 0
    %v1191 = vsel %vm459, %v1022, 0
    %v1194 = vsel %vm459, %v1027, 0
    %v1197 = vsel %vm459, %v1032, 0
    %v1200 = vsel %vm459, %v1126, 0
    %v1203 = vsel %vm459, %v1131, 0
    %v1206 = vsel %vm459, %v1136, 0
    %v1209 = vsel %vm459, %v1141, 0
    %v1212 = vsel %vm459, %v1146, 0
    %v1215 = vsel %vm459, %v1151, 0
    %v1218 = vsel %vm459, %v1156, 0
    %v1221 = vsel %vm459, %v1161, 0
    %1223 = vmatprep.subr.mxu0 0.0
    %1224 = vmatpush1.msra.mxu0 %v1164
    %1225 = vmatprep.subr.mxu0 0.0
    %1226 = vmatpush1.msra.mxu0 %v1165
    %1227 = vmatprep.subr.mxu0 0.0
    %1228 = vmatpush1.msra.mxu0 %v1166
    %1229 = vmatprep.subr.mxu0 0.0
    %1230 = vmatpush1.msra.mxu0 %v1167
    %1231 = vmatprep.subr.mxu0 0.0
    %1232 = vmatpush1.msra.mxu0 0.0
    %1233 = vmatprep.subr.mxu0 0.0
    %1234 = vmatpush1.msra.mxu0 0.0
    %1235 = vmatprep.subr.mxu0 0.0
    %1236 = vmatpush1.msra.mxu0 0.0
    %1237 = vmatprep.subr.mxu0 0.0
    %1238 = vmatpush1.msra.mxu0 0.0
    %1239 = vmatprep.subr.mxu0 0.0
    %1240 = vmatpush1.msra.mxu0 0.0
    %1241 = vmatprep.subr.mxu0 0.0
    %1242 = vmatpush1.msra.mxu0 0.0
    %1243 = vmatprep.subr.mxu0 0.0
    %1244 = vmatpush1.msra.mxu0 0.0
    %1245 = vmatprep.subr.mxu0 0.0
    %1246 = vmatpush1.msra.mxu0 0.0
    %1247 = vmatprep.subr.mxu0 0.0
    %1248 = vmatpush1.msra.mxu0 0.0
    %1249 = vmatprep.subr.mxu0 0.0
    %1250 = vmatpush1.msra.mxu0 0.0
    %1251 = vmatprep.subr.mxu0 0.0
    %1252 = vmatpush1.msra.mxu0 0.0
    %1253 = vmatprep.subr.mxu0 0.0
    %1254 = vmatpush1.msra.mxu0 0.0
    %1255 = vmatprep.subr.mxu0 0.0
    %1256 = vmatpush1.msra.mxu0 0.0
    %1257 = vmatprep.subr.mxu0 0.0
    %1258 = vmatpush1.msra.mxu0 0.0
    %1259 = vmatprep.subr.mxu0 0.0
    %1260 = vmatpush1.msra.mxu0 0.0
    %1261 = vmatprep.subr.mxu0 0.0
    %1262 = vmatpush1.msra.mxu0 0.0
    %1263 = vmatprep.subr.mxu0 0.0
    %1264 = vmatpush1.msra.mxu0 0.0
    %1265 = vmatprep.subr.mxu0 0.0
    %1266 = vmatpush1.msra.mxu0 0.0
    %1267 = vmatprep.subr.mxu0 0.0
    %1268 = vmatpush1.msra.mxu0 0.0
    %1269 = vmatprep.subr.mxu0 0.0
    %1270 = vmatpush1.msra.mxu0 0.0
    %1271 = vmatprep.subr.mxu0 0.0
    %1272 = vmatpush1.msra.mxu0 0.0
    %1273 = vmatprep.subr.mxu0 0.0
    %1274 = vmatpush1.msra.mxu0 0.0
    %1275 = vmatprep.subr.mxu0 0.0
    %1276 = vmatpush1.msra.mxu0 0.0
    %1277 = vmatprep.subr.mxu0 0.0
    %1278 = vmatpush1.msra.mxu0 0.0
    %1279 = vmatprep.subr.mxu0 0.0
    %1280 = vmatpush1.msra.mxu0 0.0
    %1281 = vmatprep.subr.mxu0 0.0
    %1282 = vmatpush1.msra.mxu0 0.0
    %1283 = vmatprep.subr.mxu0 0.0
    %1284 = vmatpush1.msra.mxu0 0.0
    %1285 = vmatprep.subr.mxu0 0.0
    %1286 = vmatpush1.msra.mxu0 0.0
    %1287 = vmatprep.mubr.f32.mxu0 0.0
    %1288 = vmatmul.mubr.f32.gmra.mrb[0].mxu0 %v1176
    %v1289 = vpop.f32.mrb[0].mxu0
    %v1290 = vadd.f32 %v1173, %v1289
    %v1291 = vpop.f32.mrb[0].mxu0
    %1292 = vmatprep.mubr.f32.mxu0 0.0
    %1293 = vmatmul.mubr.f32.gmra.mrb[0].mxu0 %v1179
    %v1294 = vpop.f32.mrb[0].mxu0
    %v1295 = vadd.f32 %v1173, %v1294
    %v1296 = vpop.f32.mrb[0].mxu0
    %1297 = vmatprep.mubr.f32.mxu0 0.0
    %1298 = vmatmul.mubr.f32.gmra.mrb[0].mxu0 %v1182
    %v1299 = vpop.f32.mrb[0].mxu0
    %v1300 = vadd.f32 %v1173, %v1299
    %v1301 = vpop.f32.mrb[0].mxu0
    %1302 = vmatprep.mubr.f32.mxu0 0.0
    %1303 = vmatmul.mubr.f32.gmra.mrb[0].mxu0 %v1185
    %v1304 = vpop.f32.mrb[0].mxu0
    %v1305 = vadd.f32 %v1173, %v1304
    %v1306 = vpop.f32.mrb[0].mxu0
    %1307 = vmatprep.mubr.f32.mxu0 0.0
    %1308 = vmatmul.mubr.f32.gmra.mrb[0].mxu0 %v1188
    %v1309 = vpop.f32.mrb[0].mxu0
    %v1310 = vadd.f32 %v1173, %v1309
    %v1311 = vpop.f32.mrb[0].mxu0
    %1312 = vmatprep.mubr.f32.mxu0 0.0
    %1313 = vmatmul.mubr.f32.gmra.mrb[0].mxu0 %v1191
    %v1314 = vpop.f32.mrb[0].mxu0
    %v1315 = vadd.f32 %v1173, %v1314
    %v1316 = vpop.f32.mrb[0].mxu0
    %1317 = vmatprep.mubr.f32.mxu0 0.0
    %1318 = vmatmul.mubr.f32.gmra.mrb[0].mxu0 %v1194
    %v1319 = vpop.f32.mrb[0].mxu0
    %v1320 = vadd.f32 %v1173, %v1319
    %v1321 = vpop.f32.mrb[0].mxu0
    %1322 = vmatprep.mubr.f32.mxu0 0.0
    %1323 = vmatmul.mubr.f32.gmra.mrb[0].mxu0 %v1197
    %v1324 = vpop.f32.mrb[0].mxu0
    %v1325 = vadd.f32 %v1173, %v1324
    %v1326 = vpop.f32.mrb[0].mxu0
    %1327 = vmatprep.mubr.f32.mxu0 0.0
    %1328 = vmatmul.mubr.f32.gmra.mrb[0].mxu0 %v1200
    %v1329 = vpop.f32.mrb[0].mxu0
    %v1330 = vadd.f32 %v1173, %v1329
    %v1331 = vpop.f32.mrb[0].mxu0
    %1332 = vmatprep.mubr.f32.mxu0 0.0
    %1333 = vmatmul.mubr.f32.gmra.mrb[0].mxu0 %v1203
    %v1334 = vpop.f32.mrb[0].mxu0
    %v1335 = vadd.f32 %v1173, %v1334
    %v1336 = vpop.f32.mrb[0].mxu0
    %1337 = vmatprep.mubr.f32.mxu0 0.0
    %1338 = vmatmul.mubr.f32.gmra.mrb[0].mxu0 %v1206
    %v1339 = vpop.f32.mrb[0].mxu0
    %v1340 = vadd.f32 %v1173, %v1339
    %v1341 = vpop.f32.mrb[0].mxu0
    %1342 = vmatprep.mubr.f32.mxu0 0.0
    %1343 = vmatmul.mubr.f32.gmra.mrb[0].mxu0 %v1209
    %v1344 = vpop.f32.mrb[0].mxu0
    %v1345 = vadd.f32 %v1173, %v1344
    %v1346 = vpop.f32.mrb[0].mxu0
    %1347 = vmatprep.mubr.f32.mxu0 0.0
    %1348 = vmatmul.mubr.f32.gmra.mrb[0].mxu0 %v1212
    %v1349 = vpop.f32.mrb[0].mxu0
    %v1350 = vadd.f32 %v1173, %v1349
    %v1351 = vpop.f32.mrb[0].mxu0
    %1352 = vmatprep.mubr.f32.mxu0 0.0
    %1353 = vmatmul.mubr.f32.gmra.mrb[0].mxu0 %v1215
    %v1354 = vpop.f32.mrb[0].mxu0
    %v1355 = vadd.f32 %v1173, %v1354
    %v1356 = vpop.f32.mrb[0].mxu0
    %1357 = vmatprep.mubr.f32.mxu0 0.0
    %1358 = vmatmul.mubr.f32.gmra.mrb[0].mxu0 %v1218
    %v1359 = vpop.f32.mrb[0].mxu0
    %v1360 = vadd.f32 %v1173, %v1359
    %v1361 = vpop.f32.mrb[0].mxu0
    %1362 = vmatprep.mubr.f32.mxu0 0.0
    %1363 = vmatmul.mubr.f32.gmra.mrb[0].mxu0 %v1221
    %v1364 = vpop.f32.mrb[0].mxu0
    %v1365 = vadd.f32 %v1173, %v1364
    %v1366 = vpop.f32.mrb[0].mxu0
    %1367 = vdwg.mxu0
    %1368 = vst [vmem:[#allocation2] sm:$0xff] %v1290
    %1369 = vst [vmem:[#allocation2 + $0x8] sm:$0xff] %v1295
    %1370 = vst [vmem:[#allocation2 + $0x10] sm:$0xff] %v1300
    %1371 = vst [vmem:[#allocation2 + $0x18] sm:$0xff] %v1305
    %1372 = vst [vmem:[#allocation2 + $0x20] sm:$0xff] %v1310
    %1373 = vst [vmem:[#allocation2 + $0x28] sm:$0xff] %v1315
    %1374 = vst [vmem:[#allocation2 + $0x30] sm:$0xff] %v1320
    %1375 = vst [vmem:[#allocation2 + $0x38] sm:$0xff] %v1325
    %1376 = vst [vmem:[#allocation2 + $0x40] sm:$0xff] %v1330
    %1377 = vst [vmem:[#allocation2 + $0x48] sm:$0xff] %v1335
    %1378 = vst [vmem:[#allocation2 + $0x50] sm:$0xff] %v1340
    %1379 = vst [vmem:[#allocation2 + $0x58] sm:$0xff] %v1345
    %1380 = vst [vmem:[#allocation2 + $0x60] sm:$0xff] %v1350
    %1381 = vst [vmem:[#allocation2 + $0x68] sm:$0xff] %v1355
    %1382 = vst [vmem:[#allocation2 + $0x70] sm:$0xff] %v1360
    %1383 = vst [vmem:[#allocation2 + $0x78] sm:$0xff] %v1365
    // Predicated region
    $region42: #{tpu_custom_call.1} parent=1 // pred_check
      _
    $region43: #{tpu_custom_call.1} parent=1 // pred_check_branch
      %1385 = sbr.rel (0) target = $region45
    $region44: #{tpu_custom_call.1} parent=1 // pred_region
      %s1387 = ssub.s32 2048, 2048
      %1388 = vsyncadd [#allocation3], %s1387
      %s1389 = sshll.u32 [#allocation2], 4
      %s1390 = int_to_ptr.vmem [resolvable:$true] %s1389
      %1395 = dma.vmem_to_hbm [thread:$0]  %s1390, 2048, %s10, [#allocation3], 128, 128, 8
    $region45: #{tpu_custom_call.1} parent=1 // pred_fallthru
      _
    // Predicated region
    $region46: #{tpu_custom_call.1} parent=1 // pred_check
      _
    $region47: #{tpu_custom_call.1} parent=1 // pred_check_branch
      %1397 = sbr.rel (0) target = $region49
    $region48: #{tpu_custom_call.1} parent=1 // pred_region
      %1398 = dma.done [#allocation3], 2048
    $region49: #{tpu_custom_call.1} parent=1 // pred_fallthru
      _
    %1399 = vsyncpa [#allocation3], 1

</llo_original>
